<compile_context>
chip_gen: v7x
topology: tpu7x:2x2x1
jax: 0.10.0
libtpu: 0.0.40
codegen_flags: <defaults>
</compile_context>

<pallas_src>
import functools

import jax
import jax.numpy as jnp
from jax import lax
from jax.experimental import pallas as pl
from jax.experimental.pallas import tpu as pltpu

BN_EPS = 1e-5


# ----------------------------------------------------------------------------
# Fused Pallas kernel: full EDANetBlock, whole batch in one invocation.
# ----------------------------------------------------------------------------
def _eda_block_kernel(*refs, k, cin0, dilations, H, W):
    """refs = (x_ref, [w1, w31a, w13a, w31b, w13b, b_all] * L, out_ref, slab)

      x_ref  : (cin0, N*H*W)        f32   lane index = n*HW + h*W + w
      w1     : (k, cin_i)           bf16  (BN0 folded)
      w31a   : (3k, k)              bf16  taps along H, dilation 1 (tap-stacked)
      w13a   : (3k, k)              bf16  taps along W, dilation 1 (BN1 folded)
      w31b   : (3k, k)              bf16  taps along H, dilation d
      w13b   : (3k, k)              bf16  taps along W, dilation d (BN2 folded)
      b_all  : (k, 5)               f32   [b1', b31a, b13a', b31b, b13b']
      out_ref: (cin0 + L*k, N*H*W)  f32   = [feat_{L-1}, ..., feat_0, x]
      slab   : (cin0 + L*k, N*H*W)  bf16  VMEM scratch (dense-input cache)
    """
    L = len(dilations)
    x_ref = refs[0]
    out_ref = refs[-2]
    slab = refs[-1]
    prm = refs[1:-2]
    NHW = x_ref.shape[-1]
    HW = H * W
    Ctot = cin0 + L * k

    # Passthrough input occupies the trailing channels; cast to bf16 once.
    x = x_ref[...]
    out_ref[Ctot - cin0:, :] = x
    slab[Ctot - cin0:, :] = x.astype(jnp.bfloat16)

    # --- boundary masks, hoisted: one per distinct (axis, step) pair --------
    pos = lax.broadcasted_iota(jnp.int32, (1, NHW), 1)  # n*HW + h*W + w
    col = pos % W                                        # w coordinate
    rowp = pos % HW                                      # h*W + w (per image)
    masks = {}
    for d in sorted(set(dilations) | {1}):
        for s in (d, -d):                                # shifts along W
            masks[("w", s)] = jnp.logical_and(col + s >= 0, col + s < W)
        for s in (d * W, -d * W):                        # shifts along H
            masks[("h", s)] = jnp.logical_and(rowp + s >= 0, rowp + s < HW)

    def shifted(v, s, axis):
        # v'[c, p] = v[c, p + s], zero outside the conv boundary (per image).
        r = pltpu.roll(v, (-s) % NHW, axis=1)
        return jnp.where(masks[(axis, s)], r, 0.0)

    def tap_conv(h_bf, w_ref, b, d, axis):
        # matmul-then-shift: one (3k,k)@(k,NHW) dot (tap outputs stacked along
        # sublanes), then XLU roll + VPU mask + add.  Masking the rolled
        # outputs == masking the rolled inputs (mask depends only on position).
        step = d if axis == "w" else d * W
        z = jnp.dot(w_ref[...], h_bf, preferred_element_type=jnp.float32)
        return (shifted(z[0:k], -step, axis)
                + z[k:2 * k]
                + shifted(z[2 * k:3 * k], step, axis)) + b

    for i, d in enumerate(dilations):
        w1, w31a, w13a, w31b, w13b, b_all = prm[6 * i: 6 * (i + 1)]
        bb = b_all[...]

        # Module input = previously produced feats + x, already resident
        # (and already bf16) in the slab scratch -> dense concat is free.
        xin = slab[(L - i) * k:, :]

        # conv1x1 (+ folded BN0) -> ReLU
        h = jnp.dot(w1[...], xin, preferred_element_type=jnp.float32) + bb[:, 0:1]
        h = jnp.maximum(h, 0.0)

        # conv3x1_1 -> conv1x3_1 (+ folded BN1) -> ReLU
        h = tap_conv(h.astype(jnp.bfloat16), w31a, bb[:, 1:2], 1, "h")
        h = tap_conv(h.astype(jnp.bfloat16), w13a, bb[:, 2:3], 1, "w")
        h = jnp.maximum(h, 0.0)

        # conv3x1_2 -> conv1x3_2 (+ folded BN2) -> ReLU   (dilated)
        h = tap_conv(h.astype(jnp.bfloat16), w31b, bb[:, 3:4], d, "h")
        h = tap_conv(h.astype(jnp.bfloat16), w13b, bb[:, 4:5], d, "w")
        h = jnp.maximum(h, 0.0)

        # TODO(synk): Dropout2d(p=0.02) is identity in eval mode; training-mode
        # per-channel dropout (pltpu PRNG) is not implemented here.
        lo = (L - 1 - i) * k
        out_ref[lo:lo + k, :] = h
        slab[lo:lo + k, :] = h.astype(jnp.bfloat16)


# ----------------------------------------------------------------------------
# Host-side parameter prep: fold BN, stack taps along rows, pack biases.
# ----------------------------------------------------------------------------
def _prep_kernel_params(p):
    def flat_stack(w, out_scale=None):   # (3, Cin, Cout) -> (3*Cout, Cin)
        if out_scale is not None:
            w = w * out_scale[None, None, :]
        return jnp.transpose(w, (0, 2, 1)).reshape(3 * w.shape[2], w.shape[1])

    w1 = (jnp.transpose(p["w1"]) * p["s0"][:, None]).astype(jnp.bfloat16)
    b1 = p["s0"] * p["b1"] + p["t0"]
    w31a = flat_stack(p["w31a"]).astype(jnp.bfloat16)
    b31a = p["b31a"]
    w13a = flat_stack(p["w13a"], p["s1"]).astype(jnp.bfloat16)
    b13a = p["s1"] * p["b13a"] + p["t1"]
    w31b = flat_stack(p["w31b"]).astype(jnp.bfloat16)
    b31b = p["b31b"]
    w13b = flat_stack(p["w13b"], p["s2"]).astype(jnp.bfloat16)
    b13b = p["s2"] * p["b13b"] + p["t2"]
    b_all = jnp.stack([b1, b31a, b13a, b31b, b13b], axis=1)   # (k, 5) f32
    return [w1, w31a, w13a, w31b, w13b, b_all]


def edanet_block(x_nchw, layer_params, dilated_list):
    """EDANetBlock forward (inference).  x: (N, C, H, W) f32 NCHW."""
    N, Cin, H, W = x_nchw.shape
    k = layer_params[0]["w1"].shape[1]
    L = len(layer_params)
    Ctot = Cin + L * k
    NHW = N * H * W

    # Channels-first, batch folded into the lane dimension: (Cin, N*H*W).
    x = jnp.transpose(x_nchw, (1, 0, 2, 3)).reshape(Cin, NHW)

    flat_params = []
    for p in layer_params:
        flat_params += _prep_kernel_params(p)

    out = pl.pallas_call(
        functools.partial(_eda_block_kernel, k=k, cin0=Cin,
                          dilations=tuple(int(d) for d in dilated_list),
                          H=H, W=W),
        out_shape=jax.ShapeDtypeStruct((Ctot, NHW), jnp.float32),
        grid=(1,),
        in_specs=[pl.BlockSpec((Cin, NHW), lambda i: (0, 0))]
                 + [pl.BlockSpec(a.shape, lambda i: (0, 0)) for a in flat_params],
        out_specs=pl.BlockSpec((Ctot, NHW), lambda i: (0, 0)),
        scratch_shapes=[pltpu.VMEM((Ctot, NHW), jnp.bfloat16)],
        compiler_params=pltpu.CompilerParams(
            dimension_semantics=("arbitrary",)),
    )(x, *flat_params)

    return jnp.transpose(out.reshape(Ctot, N, H, W), (1, 0, 2, 3))


# ----------------------------------------------------------------------------
# Deterministic synthetic parameters (BatchNorm given as scale/shift).
# ----------------------------------------------------------------------------
def init_eda_module_params(key, cin, k):
    ks = jax.random.split(key, 13)

    def w(kk, shape, scale=0.1):
        return jax.random.normal(kk, shape, jnp.float32) * scale

    def bn(kk):
        k1, k2, k3, k4 = jax.random.split(kk, 4)
        gamma = 1.0 + 0.1 * jax.random.normal(k1, (k,), jnp.float32)
        beta = 0.1 * jax.random.normal(k2, (k,), jnp.float32)
        mean = 0.1 * jax.random.normal(k3, (k,), jnp.float32)
        var = jnp.abs(jax.random.normal(k4, (k,), jnp.float32)) * 0.5 + 0.5
        scale = gamma / jnp.sqrt(var + BN_EPS)
        shift = beta - mean * scale
        return scale, shift

    p = {}
    p["w1"] = w(ks[0], (cin, k))              # conv1x1: (Cin, Cout)
    p["b1"] = w(ks[1], (k,))
    p["s0"], p["t0"] = bn(ks[2])
    p["w31a"] = w(ks[3], (3, k, k))           # (tap, Cin, Cout) along H
    p["b31a"] = w(ks[4], (k,))
    p["w13a"] = w(ks[5], (3, k, k))           # (tap, Cin, Cout) along W
    p["b13a"] = w(ks[6], (k,))
    p["s1"], p["t1"] = bn(ks[7])
    p["w31b"] = w(ks[8], (3, k, k))
    p["b31b"] = w(ks[9], (k,))
    p["w13b"] = w(ks[10], (3, k, k))
    p["b13b"] = w(ks[11], (k,))
    p["s2"], p["t2"] = bn(ks[12])
    return p


# ----------------------------------------------------------------------------
# Pure-JAX f32 reference (lax.conv_general_dilated) for validation.
# ----------------------------------------------------------------------------
def _conv_ref(x, w_hwio, b, rhs_dilation, padding):
    y = lax.conv_general_dilated(
        x, w_hwio, window_strides=(1, 1), padding=padding,
        rhs_dilation=rhs_dilation,
        dimension_numbers=("NHWC", "HWIO", "NHWC"))
    return y + b.reshape(1, 1, 1, -1)


def eda_module_ref(x, p, d):
    k = p["w1"].shape[1]
    a = lambda s: s.reshape(1, 1, 1, k)
    h = _conv_ref(x, p["w1"][None, None], p["b1"], (1, 1), ((0, 0), (0, 0)))
    h = jnp.maximum(h * a(p["s0"]) + a(p["t0"]), 0.0)
    h = _conv_ref(h, p["w31a"][:, None], p["b31a"], (1, 1), ((1, 1), (0, 0)))
    h = _conv_ref(h, p["w13a"][None, :], p["b13a"], (1, 1), ((0, 0), (1, 1)))
    h = jnp.maximum(h * a(p["s1"]) + a(p["t1"]), 0.0)
    h = _conv_ref(h, p["w31b"][:, None], p["b31b"], (d, 1), ((d, d), (0, 0)))
    h = _conv_ref(h, p["w13b"][None, :], p["b13b"], (1, d), ((0, 0), (d, d)))
    h = jnp.maximum(h * a(p["s2"]) + a(p["t2"]), 0.0)
    return jnp.concatenate([h, x], axis=-1)


if __name__ == "__main__":
    # EDANetBlock(in_channels=4, num_dense_layer=2, dilated=[1, 2], growth_rate=8)
    in_channels, num_dense_layer, growth_rate = 4, 2, 8
    dilated = [1, 2]
    N, H, W = 2, 16, 16

    key = jax.random.PRNGKey(0)
    kx, kp = jax.random.split(key)
    x = jax.random.normal(kx, (N, in_channels, H, W), jnp.float32)

    layer_params = []
    cin = in_channels
    for i in range(num_dense_layer):
        layer_params.append(
            init_eda_module_params(jax.random.fold_in(kp, i), cin, growth_rate))
        cin += growth_rate

    out = edanet_block(x, layer_params, dilated)
    out = jax.block_until_ready(out)

    # validate against pure-JAX f32 reference (kernel uses bf16 MXU operands)
    ref = jnp.transpose(x, (0, 2, 3, 1))
    for p, d in zip(layer_params, dilated):
        ref = eda_module_ref(ref, p, d)
    ref = jnp.transpose(ref, (0, 3, 1, 2))

    assert out.shape == (N, in_channels + num_dense_layer * growth_rate, H, W)
    assert bool(jnp.all(jnp.isfinite(out)))
    assert bool(jnp.allclose(out, ref, atol=2e-2, rtol=2e-2))
    print("KERNEL_OK")
</pallas_src>

<mosaic_0001>
module attributes {stable_mosaic.version = 11 : i64} {
  func.func @_eda_block_kernel(%arg0: i32, %arg1: memref<4x512xf32, #tpu.memory_space<vmem>>, %arg2: memref<8x4xbf16, #tpu.memory_space<vmem>>, %arg3: memref<24x8xbf16, #tpu.memory_space<vmem>>, %arg4: memref<24x8xbf16, #tpu.memory_space<vmem>>, %arg5: memref<24x8xbf16, #tpu.memory_space<vmem>>, %arg6: memref<24x8xbf16, #tpu.memory_space<vmem>>, %arg7: memref<8x5xf32, #tpu.memory_space<vmem>>, %arg8: memref<8x12xbf16, #tpu.memory_space<vmem>>, %arg9: memref<24x8xbf16, #tpu.memory_space<vmem>>, %arg10: memref<24x8xbf16, #tpu.memory_space<vmem>>, %arg11: memref<24x8xbf16, #tpu.memory_space<vmem>>, %arg12: memref<24x8xbf16, #tpu.memory_space<vmem>>, %arg13: memref<8x5xf32, #tpu.memory_space<vmem>>, %arg14: memref<20x512xf32, #tpu.memory_space<vmem>>, %arg15: memref<20x512xbf16, #tpu.memory_space<vmem>>) attributes {dimension_semantics = [#tpu.dimension_semantics<arbitrary>], iteration_bounds = array<i64: 1>, scalar_prefetch = 0 : i64, scratch_operands = 1 : i64, tpu.core_type = #tpu.core_type<tc>, window_params = [{pipeline_mode = #tpu.pipeline_mode<synchronous>, transform_indices = @transform_0, window_bounds = array<i64: 4, 512>}, {pipeline_mode = #tpu.pipeline_mode<synchronous>, transform_indices = @transform_1, window_bounds = array<i64: 8, 4>}, {pipeline_mode = #tpu.pipeline_mode<synchronous>, transform_indices = @transform_2, window_bounds = array<i64: 24, 8>}, {pipeline_mode = #tpu.pipeline_mode<synchronous>, transform_indices = @transform_3, window_bounds = array<i64: 24, 8>}, {pipeline_mode = #tpu.pipeline_mode<synchronous>, transform_indices = @transform_4, window_bounds = array<i64: 24, 8>}, {pipeline_mode = #tpu.pipeline_mode<synchronous>, transform_indices = @transform_5, window_bounds = array<i64: 24, 8>}, {pipeline_mode = #tpu.pipeline_mode<synchronous>, transform_indices = @transform_6, window_bounds = array<i64: 8, 5>}, {pipeline_mode = #tpu.pipeline_mode<synchronous>, transform_indices = @transform_7, window_bounds = array<i64: 8, 12>}, {pipeline_mode = #tpu.pipeline_mode<synchronous>, transform_indices = @transform_8, window_bounds = array<i64: 24, 8>}, {pipeline_mode = #tpu.pipeline_mode<synchronous>, transform_indices = @transform_9, window_bounds = array<i64: 24, 8>}, {pipeline_mode = #tpu.pipeline_mode<synchronous>, transform_indices = @transform_10, window_bounds = array<i64: 24, 8>}, {pipeline_mode = #tpu.pipeline_mode<synchronous>, transform_indices = @transform_11, window_bounds = array<i64: 24, 8>}, {pipeline_mode = #tpu.pipeline_mode<synchronous>, transform_indices = @transform_12, window_bounds = array<i64: 8, 5>}, {pipeline_mode = #tpu.pipeline_mode<synchronous>, transform_indices = @transform_13, window_bounds = array<i64: 20, 512>}]} {
    %c0 = arith.constant 0 : index
    %c0_0 = arith.constant 0 : index
    %0 = vector.load %arg1[%c0, %c0_0] : memref<4x512xf32, #tpu.memory_space<vmem>>, vector<4x512xf32>
    %c16 = arith.constant 16 : index
    %c0_1 = arith.constant 0 : index
    %1 = vector.load %arg14[%c16, %c0_1] : memref<20x512xf32, #tpu.memory_space<vmem>>, vector<4x512xf32>
    tpu.vector_store %arg14[%c16, %c0_1], %0 {strides = array<i32>} : memref<20x512xf32, #tpu.memory_space<vmem>>, vector<4x512xf32>,
    %2 = arith.truncf %0 : vector<4x512xf32> to vector<4x512xbf16>
    %c16_2 = arith.constant 16 : index
    %c0_3 = arith.constant 0 : index
    %3 = vector.load %arg15[%c16_2, %c0_3] : memref<20x512xbf16, #tpu.memory_space<vmem>>, vector<4x512xbf16>
    tpu.vector_store %arg15[%c16_2, %c0_3], %2 {strides = array<i32>} : memref<20x512xbf16, #tpu.memory_space<vmem>>, vector<4x512xbf16>,
    %4 = tpu.iota {dimensions = array<i32: 1>} : vector<1x512xi32>
    %c16_i32 = arith.constant 16 : i32
    %c0_i32 = arith.constant 0 : i32
    %5 = arith.cmpi eq, %c16_i32, %c0_i32 : i32
    %c1_i32 = arith.constant 1 : i32
    %6 = arith.select %5, %c1_i32, %c16_i32 : i32
    %7 = vector.broadcast %6 : i32 to vector<1x512xi32>
    %8 = arith.remsi %4, %7 : vector<1x512xi32>
    %c0_i32_4 = arith.constant 0 : i32
    %9 = vector.broadcast %c0_i32_4 : i32 to vector<1x512xi32>
    %10 = arith.cmpi ne, %8, %9 : vector<1x512xi32>
    %c0_i32_5 = arith.constant 0 : i32
    %11 = vector.broadcast %c0_i32_5 : i32 to vector<1x512xi32>
    %12 = arith.cmpi slt, %8, %11 : vector<1x512xi32>
    %c0_i32_6 = arith.constant 0 : i32
    %13 = arith.cmpi slt, %6, %c0_i32_6 : i32
    %14 = vector.broadcast %13 : i1 to vector<1x512xi1>
    %15 = vector.broadcast %14 : vector<1x512xi1> to vector<1x512xi1>
    %16 = arith.xori %12, %15 : vector<1x512xi1>
    %17 = arith.andi %16, %10 : vector<1x512xi1>
    %18 = vector.broadcast %6 : i32 to vector<1x512xi32>
    %19 = arith.addi %8, %18 : vector<1x512xi32>
    %20 = arith.select %17, %19, %8 : vector<1x512xi1>, vector<1x512xi32>
    %c256_i32 = arith.constant 256 : i32
    %c0_i32_7 = arith.constant 0 : i32
    %21 = arith.cmpi eq, %c256_i32, %c0_i32_7 : i32
    %c1_i32_8 = arith.constant 1 : i32
    %22 = arith.select %21, %c1_i32_8, %c256_i32 : i32
    %23 = vector.broadcast %22 : i32 to vector<1x512xi32>
    %24 = arith.remsi %4, %23 : vector<1x512xi32>
    %c0_i32_9 = arith.constant 0 : i32
    %25 = vector.broadcast %c0_i32_9 : i32 to vector<1x512xi32>
    %26 = arith.cmpi ne, %24, %25 : vector<1x512xi32>
    %c0_i32_10 = arith.constant 0 : i32
    %27 = vector.broadcast %c0_i32_10 : i32 to vector<1x512xi32>
    %28 = arith.cmpi slt, %24, %27 : vector<1x512xi32>
    %c0_i32_11 = arith.constant 0 : i32
    %29 = arith.cmpi slt, %22, %c0_i32_11 : i32
    %30 = vector.broadcast %29 : i1 to vector<1x512xi1>
    %31 = vector.broadcast %30 : vector<1x512xi1> to vector<1x512xi1>
    %32 = arith.xori %28, %31 : vector<1x512xi1>
    %33 = arith.andi %32, %26 : vector<1x512xi1>
    %34 = vector.broadcast %22 : i32 to vector<1x512xi32>
    %35 = arith.addi %24, %34 : vector<1x512xi32>
    %36 = arith.select %33, %35, %24 : vector<1x512xi1>, vector<1x512xi32>
    %c1_i32_12 = arith.constant 1 : i32
    %37 = vector.broadcast %c1_i32_12 : i32 to vector<1x512xi32>
    %38 = arith.addi %20, %37 : vector<1x512xi32>
    %c0_i32_13 = arith.constant 0 : i32
    %39 = vector.broadcast %c0_i32_13 : i32 to vector<1x512xi32>
    %40 = arith.cmpi sge, %38, %39 : vector<1x512xi32>
    %c1_i32_14 = arith.constant 1 : i32
    %41 = vector.broadcast %c1_i32_14 : i32 to vector<1x512xi32>
    %42 = arith.addi %20, %41 : vector<1x512xi32>
    %c16_i32_15 = arith.constant 16 : i32
    %43 = vector.broadcast %c16_i32_15 : i32 to vector<1x512xi32>
    %44 = arith.cmpi slt, %42, %43 : vector<1x512xi32>
    %45 = arith.andi %40, %44 : vector<1x512xi1>
    %c-1_i32 = arith.constant -1 : i32
    %46 = vector.broadcast %c-1_i32 : i32 to vector<1x512xi32>
    %47 = arith.addi %20, %46 : vector<1x512xi32>
    %c0_i32_16 = arith.constant 0 : i32
    %48 = vector.broadcast %c0_i32_16 : i32 to vector<1x512xi32>
    %49 = arith.cmpi sge, %47, %48 : vector<1x512xi32>
    %c-1_i32_17 = arith.constant -1 : i32
    %50 = vector.broadcast %c-1_i32_17 : i32 to vector<1x512xi32>
    %51 = arith.addi %20, %50 : vector<1x512xi32>
    %c16_i32_18 = arith.constant 16 : i32
    %52 = vector.broadcast %c16_i32_18 : i32 to vector<1x512xi32>
    %53 = arith.cmpi slt, %51, %52 : vector<1x512xi32>
    %54 = arith.andi %49, %53 : vector<1x512xi1>
    %c16_i32_19 = arith.constant 16 : i32
    %55 = vector.broadcast %c16_i32_19 : i32 to vector<1x512xi32>
    %56 = arith.addi %36, %55 : vector<1x512xi32>
    %c0_i32_20 = arith.constant 0 : i32
    %57 = vector.broadcast %c0_i32_20 : i32 to vector<1x512xi32>
    %58 = arith.cmpi sge, %56, %57 : vector<1x512xi32>
    %c16_i32_21 = arith.constant 16 : i32
    %59 = vector.broadcast %c16_i32_21 : i32 to vector<1x512xi32>
    %60 = arith.addi %36, %59 : vector<1x512xi32>
    %c256_i32_22 = arith.constant 256 : i32
    %61 = vector.broadcast %c256_i32_22 : i32 to vector<1x512xi32>
    %62 = arith.cmpi slt, %60, %61 : vector<1x512xi32>
    %63 = arith.andi %58, %62 : vector<1x512xi1>
    %c-16_i32 = arith.constant -16 : i32
    %64 = vector.broadcast %c-16_i32 : i32 to vector<1x512xi32>
    %65 = arith.addi %36, %64 : vector<1x512xi32>
    %c0_i32_23 = arith.constant 0 : i32
    %66 = vector.broadcast %c0_i32_23 : i32 to vector<1x512xi32>
    %67 = arith.cmpi sge, %65, %66 : vector<1x512xi32>
    %c-16_i32_24 = arith.constant -16 : i32
    %68 = vector.broadcast %c-16_i32_24 : i32 to vector<1x512xi32>
    %69 = arith.addi %36, %68 : vector<1x512xi32>
    %c256_i32_25 = arith.constant 256 : i32
    %70 = vector.broadcast %c256_i32_25 : i32 to vector<1x512xi32>
    %71 = arith.cmpi slt, %69, %70 : vector<1x512xi32>
    %72 = arith.andi %67, %71 : vector<1x512xi1>
    %c2_i32 = arith.constant 2 : i32
    %73 = vector.broadcast %c2_i32 : i32 to vector<1x512xi32>
    %74 = arith.addi %20, %73 : vector<1x512xi32>
    %c0_i32_26 = arith.constant 0 : i32
    %75 = vector.broadcast %c0_i32_26 : i32 to vector<1x512xi32>
    %76 = arith.cmpi sge, %74, %75 : vector<1x512xi32>
    %c2_i32_27 = arith.constant 2 : i32
    %77 = vector.broadcast %c2_i32_27 : i32 to vector<1x512xi32>
    %78 = arith.addi %20, %77 : vector<1x512xi32>
    %c16_i32_28 = arith.constant 16 : i32
    %79 = vector.broadcast %c16_i32_28 : i32 to vector<1x512xi32>
    %80 = arith.cmpi slt, %78, %79 : vector<1x512xi32>
    %81 = arith.andi %76, %80 : vector<1x512xi1>
    %c-2_i32 = arith.constant -2 : i32
    %82 = vector.broadcast %c-2_i32 : i32 to vector<1x512xi32>
    %83 = arith.addi %20, %82 : vector<1x512xi32>
    %c0_i32_29 = arith.constant 0 : i32
    %84 = vector.broadcast %c0_i32_29 : i32 to vector<1x512xi32>
    %85 = arith.cmpi sge, %83, %84 : vector<1x512xi32>
    %c-2_i32_30 = arith.constant -2 : i32
    %86 = vector.broadcast %c-2_i32_30 : i32 to vector<1x512xi32>
    %87 = arith.addi %20, %86 : vector<1x512xi32>
    %c16_i32_31 = arith.constant 16 : i32
    %88 = vector.broadcast %c16_i32_31 : i32 to vector<1x512xi32>
    %89 = arith.cmpi slt, %87, %88 : vector<1x512xi32>
    %90 = arith.andi %85, %89 : vector<1x512xi1>
    %c32_i32 = arith.constant 32 : i32
    %91 = vector.broadcast %c32_i32 : i32 to vector<1x512xi32>
    %92 = arith.addi %36, %91 : vector<1x512xi32>
    %c0_i32_32 = arith.constant 0 : i32
    %93 = vector.broadcast %c0_i32_32 : i32 to vector<1x512xi32>
    %94 = arith.cmpi sge, %92, %93 : vector<1x512xi32>
    %c32_i32_33 = arith.constant 32 : i32
    %95 = vector.broadcast %c32_i32_33 : i32 to vector<1x512xi32>
    %96 = arith.addi %36, %95 : vector<1x512xi32>
    %c256_i32_34 = arith.constant 256 : i32
    %97 = vector.broadcast %c256_i32_34 : i32 to vector<1x512xi32>
    %98 = arith.cmpi slt, %96, %97 : vector<1x512xi32>
    %99 = arith.andi %94, %98 : vector<1x512xi1>
    %c-32_i32 = arith.constant -32 : i32
    %100 = vector.broadcast %c-32_i32 : i32 to vector<1x512xi32>
    %101 = arith.addi %36, %100 : vector<1x512xi32>
    %c0_i32_35 = arith.constant 0 : i32
    %102 = vector.broadcast %c0_i32_35 : i32 to vector<1x512xi32>
    %103 = arith.cmpi sge, %101, %102 : vector<1x512xi32>
    %c-32_i32_36 = arith.constant -32 : i32
    %104 = vector.broadcast %c-32_i32_36 : i32 to vector<1x512xi32>
    %105 = arith.addi %36, %104 : vector<1x512xi32>
    %c256_i32_37 = arith.constant 256 : i32
    %106 = vector.broadcast %c256_i32_37 : i32 to vector<1x512xi32>
    %107 = arith.cmpi slt, %105, %106 : vector<1x512xi32>
    %108 = arith.andi %103, %107 : vector<1x512xi1>
    %c0_38 = arith.constant 0 : index
    %c0_39 = arith.constant 0 : index
    %109 = vector.load %arg7[%c0_38, %c0_39] : memref<8x5xf32, #tpu.memory_space<vmem>>, vector<8x5xf32>
    %c16_40 = arith.constant 16 : index
    %c0_41 = arith.constant 0 : index
    %110 = vector.load %arg15[%c16_40, %c0_41] : memref<20x512xbf16, #tpu.memory_space<vmem>>, vector<4x512xbf16>
    %c0_42 = arith.constant 0 : index
    %c0_43 = arith.constant 0 : index
    %111 = vector.load %arg2[%c0_42, %c0_43] : memref<8x4xbf16, #tpu.memory_space<vmem>>, vector<8x4xbf16>
    %cst = arith.constant dense<0.000000e+00> : vector<8x512xf32>
    %112 = tpu.matmul %111, %110, %cst {dimension_numbers = #tpu.dot_dimension_numbers<[1], [0], [0], [1], [0, 0, 1, 1], [], []>} : vector<8x4xbf16>, vector<4x512xbf16>, vector<8x512xf32> -> vector<8x512xf32>
    %113 = vector.extract_strided_slice %109 {offsets = [0, 0], sizes = [8, 1], strides = [1, 1]} : vector<8x5xf32> to vector<8x1xf32>
    %114 = vector.broadcast %113 : vector<8x1xf32> to vector<8x512xf32>
    %115 = arith.addf %112, %114 : vector<8x512xf32>
    %cst_44 = arith.constant 0.000000e+00 : f32
    %116 = vector.broadcast %cst_44 : f32 to vector<8x512xf32>
    %117 = arith.maximumf %115, %116 : vector<8x512xf32>
    %118 = arith.truncf %117 : vector<8x512xf32> to vector<8x512xbf16>
    %119 = vector.extract_strided_slice %109 {offsets = [0, 1], sizes = [8, 1], strides = [1, 1]} : vector<8x5xf32> to vector<8x1xf32>
    %c0_45 = arith.constant 0 : index
    %c0_46 = arith.constant 0 : index
    %120 = vector.load %arg3[%c0_45, %c0_46] : memref<24x8xbf16, #tpu.memory_space<vmem>>, vector<24x8xbf16>
    %cst_47 = arith.constant dense<0.000000e+00> : vector<24x512xf32>
    %121 = tpu.matmul %120, %118, %cst_47 {dimension_numbers = #tpu.dot_dimension_numbers<[1], [0], [0], [1], [0, 0, 1, 1], [], []>} : vector<24x8xbf16>, vector<8x512xbf16>, vector<24x512xf32> -> vector<24x512xf32>
    %122 = vector.extract_strided_slice %121 {offsets = [0, 0], sizes = [8, 512], strides = [1, 1]} : vector<24x512xf32> to vector<8x512xf32>
    %c16_i32_48 = arith.constant 16 : i32
    %123 = tpu.dynamic_rotate %122 by %c16_i32_48 dim 1 : vector<8x512xf32>, i32 -> vector<8x512xf32>
    %cst_49 = arith.constant 0.000000e+00 : f32
    %124 = vector.shape_cast %72 : vector<1x512xi1> to vector<1x512xi1>
    %125 = vector.broadcast %124 : vector<1x512xi1> to vector<8x512xi1>
    %126 = vector.broadcast %cst_49 : f32 to vector<8x512xf32>
    %127 = arith.select %125, %123, %126 : vector<8x512xi1>, vector<8x512xf32>
    %128 = vector.extract_strided_slice %121 {offsets = [8, 0], sizes = [8, 512], strides = [1, 1]} : vector<24x512xf32> to vector<8x512xf32>
    %129 = arith.addf %127, %128 : vector<8x512xf32>
    %130 = vector.extract_strided_slice %121 {offsets = [16, 0], sizes = [8, 512], strides = [1, 1]} : vector<24x512xf32> to vector<8x512xf32>
    %c496_i32 = arith.constant 496 : i32
    %131 = tpu.dynamic_rotate %130 by %c496_i32 dim 1 : vector<8x512xf32>, i32 -> vector<8x512xf32>
    %cst_50 = arith.constant 0.000000e+00 : f32
    %132 = vector.shape_cast %63 : vector<1x512xi1> to vector<1x512xi1>
    %133 = vector.broadcast %132 : vector<1x512xi1> to vector<8x512xi1>
    %134 = vector.broadcast %cst_50 : f32 to vector<8x512xf32>
    %135 = arith.select %133, %131, %134 : vector<8x512xi1>, vector<8x512xf32>
    %136 = arith.addf %129, %135 : vector<8x512xf32>
    %137 = vector.broadcast %119 : vector<8x1xf32> to vector<8x512xf32>
    %138 = arith.addf %136, %137 : vector<8x512xf32>
    %139 = arith.truncf %138 : vector<8x512xf32> to vector<8x512xbf16>
    %140 = vector.extract_strided_slice %109 {offsets = [0, 2], sizes = [8, 1], strides = [1, 1]} : vector<8x5xf32> to vector<8x1xf32>
    %c0_51 = arith.constant 0 : index
    %c0_52 = arith.constant 0 : index
    %141 = vector.load %arg4[%c0_51, %c0_52] : memref<24x8xbf16, #tpu.memory_space<vmem>>, vector<24x8xbf16>
    %cst_53 = arith.constant dense<0.000000e+00> : vector<24x512xf32>
    %142 = tpu.matmul %141, %139, %cst_53 {dimension_numbers = #tpu.dot_dimension_numbers<[1], [0], [0], [1], [0, 0, 1, 1], [], []>} : vector<24x8xbf16>, vector<8x512xbf16>, vector<24x512xf32> -> vector<24x512xf32>
    %143 = vector.extract_strided_slice %142 {offsets = [0, 0], sizes = [8, 512], strides = [1, 1]} : vector<24x512xf32> to vector<8x512xf32>
    %c1_i32_54 = arith.constant 1 : i32
    %144 = tpu.dynamic_rotate %143 by %c1_i32_54 dim 1 : vector<8x512xf32>, i32 -> vector<8x512xf32>
    %cst_55 = arith.constant 0.000000e+00 : f32
    %145 = vector.shape_cast %54 : vector<1x512xi1> to vector<1x512xi1>
    %146 = vector.broadcast %145 : vector<1x512xi1> to vector<8x512xi1>
    %147 = vector.broadcast %cst_55 : f32 to vector<8x512xf32>
    %148 = arith.select %146, %144, %147 : vector<8x512xi1>, vector<8x512xf32>
    %149 = vector.extract_strided_slice %142 {offsets = [8, 0], sizes = [8, 512], strides = [1, 1]} : vector<24x512xf32> to vector<8x512xf32>
    %150 = arith.addf %148, %149 : vector<8x512xf32>
    %151 = vector.extract_strided_slice %142 {offsets = [16, 0], sizes = [8, 512], strides = [1, 1]} : vector<24x512xf32> to vector<8x512xf32>
    %c511_i32 = arith.constant 511 : i32
    %152 = tpu.dynamic_rotate %151 by %c511_i32 dim 1 : vector<8x512xf32>, i32 -> vector<8x512xf32>
    %cst_56 = arith.constant 0.000000e+00 : f32
    %153 = vector.shape_cast %45 : vector<1x512xi1> to vector<1x512xi1>
    %154 = vector.broadcast %153 : vector<1x512xi1> to vector<8x512xi1>
    %155 = vector.broadcast %cst_56 : f32 to vector<8x512xf32>
    %156 = arith.select %154, %152, %155 : vector<8x512xi1>, vector<8x512xf32>
    %157 = arith.addf %150, %156 : vector<8x512xf32>
    %158 = vector.broadcast %140 : vector<8x1xf32> to vector<8x512xf32>
    %159 = arith.addf %157, %158 : vector<8x512xf32>
    %cst_57 = arith.constant 0.000000e+00 : f32
    %160 = vector.broadcast %cst_57 : f32 to vector<8x512xf32>
    %161 = arith.maximumf %159, %160 : vector<8x512xf32>
    %162 = arith.truncf %161 : vector<8x512xf32> to vector<8x512xbf16>
    %163 = vector.extract_strided_slice %109 {offsets = [0, 3], sizes = [8, 1], strides = [1, 1]} : vector<8x5xf32> to vector<8x1xf32>
    %c0_58 = arith.constant 0 : index
    %c0_59 = arith.constant 0 : index
    %164 = vector.load %arg5[%c0_58, %c0_59] : memref<24x8xbf16, #tpu.memory_space<vmem>>, vector<24x8xbf16>
    %cst_60 = arith.constant dense<0.000000e+00> : vector<24x512xf32>
    %165 = tpu.matmul %164, %162, %cst_60 {dimension_numbers = #tpu.dot_dimension_numbers<[1], [0], [0], [1], [0, 0, 1, 1], [], []>} : vector<24x8xbf16>, vector<8x512xbf16>, vector<24x512xf32> -> vector<24x512xf32>
    %166 = vector.extract_strided_slice %165 {offsets = [0, 0], sizes = [8, 512], strides = [1, 1]} : vector<24x512xf32> to vector<8x512xf32>
    %c16_i32_61 = arith.constant 16 : i32
    %167 = tpu.dynamic_rotate %166 by %c16_i32_61 dim 1 : vector<8x512xf32>, i32 -> vector<8x512xf32>
    %cst_62 = arith.constant 0.000000e+00 : f32
    %168 = vector.shape_cast %72 : vector<1x512xi1> to vector<1x512xi1>
    %169 = vector.broadcast %168 : vector<1x512xi1> to vector<8x512xi1>
    %170 = vector.broadcast %cst_62 : f32 to vector<8x512xf32>
    %171 = arith.select %169, %167, %170 : vector<8x512xi1>, vector<8x512xf32>
    %172 = vector.extract_strided_slice %165 {offsets = [8, 0], sizes = [8, 512], strides = [1, 1]} : vector<24x512xf32> to vector<8x512xf32>
    %173 = arith.addf %171, %172 : vector<8x512xf32>
    %174 = vector.extract_strided_slice %165 {offsets = [16, 0], sizes = [8, 512], strides = [1, 1]} : vector<24x512xf32> to vector<8x512xf32>
    %c496_i32_63 = arith.constant 496 : i32
    %175 = tpu.dynamic_rotate %174 by %c496_i32_63 dim 1 : vector<8x512xf32>, i32 -> vector<8x512xf32>
    %cst_64 = arith.constant 0.000000e+00 : f32
    %176 = vector.shape_cast %63 : vector<1x512xi1> to vector<1x512xi1>
    %177 = vector.broadcast %176 : vector<1x512xi1> to vector<8x512xi1>
    %178 = vector.broadcast %cst_64 : f32 to vector<8x512xf32>
    %179 = arith.select %177, %175, %178 : vector<8x512xi1>, vector<8x512xf32>
    %180 = arith.addf %173, %179 : vector<8x512xf32>
    %181 = vector.broadcast %163 : vector<8x1xf32> to vector<8x512xf32>
    %182 = arith.addf %180, %181 : vector<8x512xf32>
    %183 = arith.truncf %182 : vector<8x512xf32> to vector<8x512xbf16>
    %184 = vector.extract_strided_slice %109 {offsets = [0, 4], sizes = [8, 1], strides = [1, 1]} : vector<8x5xf32> to vector<8x1xf32>
    %c0_65 = arith.constant 0 : index
    %c0_66 = arith.constant 0 : index
    %185 = vector.load %arg6[%c0_65, %c0_66] : memref<24x8xbf16, #tpu.memory_space<vmem>>, vector<24x8xbf16>
    %cst_67 = arith.constant dense<0.000000e+00> : vector<24x512xf32>
    %186 = tpu.matmul %185, %183, %cst_67 {dimension_numbers = #tpu.dot_dimension_numbers<[1], [0], [0], [1], [0, 0, 1, 1], [], []>} : vector<24x8xbf16>, vector<8x512xbf16>, vector<24x512xf32> -> vector<24x512xf32>
    %187 = vector.extract_strided_slice %186 {offsets = [0, 0], sizes = [8, 512], strides = [1, 1]} : vector<24x512xf32> to vector<8x512xf32>
    %c1_i32_68 = arith.constant 1 : i32
    %188 = tpu.dynamic_rotate %187 by %c1_i32_68 dim 1 : vector<8x512xf32>, i32 -> vector<8x512xf32>
    %cst_69 = arith.constant 0.000000e+00 : f32
    %189 = vector.shape_cast %54 : vector<1x512xi1> to vector<1x512xi1>
    %190 = vector.broadcast %189 : vector<1x512xi1> to vector<8x512xi1>
    %191 = vector.broadcast %cst_69 : f32 to vector<8x512xf32>
    %192 = arith.select %190, %188, %191 : vector<8x512xi1>, vector<8x512xf32>
    %193 = vector.extract_strided_slice %186 {offsets = [8, 0], sizes = [8, 512], strides = [1, 1]} : vector<24x512xf32> to vector<8x512xf32>
    %194 = arith.addf %192, %193 : vector<8x512xf32>
    %195 = vector.extract_strided_slice %186 {offsets = [16, 0], sizes = [8, 512], strides = [1, 1]} : vector<24x512xf32> to vector<8x512xf32>
    %c511_i32_70 = arith.constant 511 : i32
    %196 = tpu.dynamic_rotate %195 by %c511_i32_70 dim 1 : vector<8x512xf32>, i32 -> vector<8x512xf32>
    %cst_71 = arith.constant 0.000000e+00 : f32
    %197 = vector.shape_cast %45 : vector<1x512xi1> to vector<1x512xi1>
    %198 = vector.broadcast %197 : vector<1x512xi1> to vector<8x512xi1>
    %199 = vector.broadcast %cst_71 : f32 to vector<8x512xf32>
    %200 = arith.select %198, %196, %199 : vector<8x512xi1>, vector<8x512xf32>
    %201 = arith.addf %194, %200 : vector<8x512xf32>
    %202 = vector.broadcast %184 : vector<8x1xf32> to vector<8x512xf32>
    %203 = arith.addf %201, %202 : vector<8x512xf32>
    %cst_72 = arith.constant 0.000000e+00 : f32
    %204 = vector.broadcast %cst_72 : f32 to vector<8x512xf32>
    %205 = arith.maximumf %203, %204 : vector<8x512xf32>
    %c8 = arith.constant 8 : index
    %c0_73 = arith.constant 0 : index
    %206 = vector.load %arg14[%c8, %c0_73] : memref<20x512xf32, #tpu.memory_space<vmem>>, vector<8x512xf32>
    tpu.vector_store %arg14[%c8, %c0_73], %205 {strides = array<i32>} : memref<20x512xf32, #tpu.memory_space<vmem>>, vector<8x512xf32>,
    %207 = arith.truncf %205 : vector<8x512xf32> to vector<8x512xbf16>
    %c8_74 = arith.constant 8 : index
    %c0_75 = arith.constant 0 : index
    %208 = vector.load %arg15[%c8_74, %c0_75] : memref<20x512xbf16, #tpu.memory_space<vmem>>, vector<8x512xbf16>
    tpu.vector_store %arg15[%c8_74, %c0_75], %207 {strides = array<i32>} : memref<20x512xbf16, #tpu.memory_space<vmem>>, vector<8x512xbf16>,
    %c0_76 = arith.constant 0 : index
    %c0_77 = arith.constant 0 : index
    %209 = vector.load %arg13[%c0_76, %c0_77] : memref<8x5xf32, #tpu.memory_space<vmem>>, vector<8x5xf32>
    %c8_78 = arith.constant 8 : index
    %c0_79 = arith.constant 0 : index
    %210 = vector.load %arg15[%c8_78, %c0_79] : memref<20x512xbf16, #tpu.memory_space<vmem>>, vector<12x512xbf16>
    %c0_80 = arith.constant 0 : index
    %c0_81 = arith.constant 0 : index
    %211 = vector.load %arg8[%c0_80, %c0_81] : memref<8x12xbf16, #tpu.memory_space<vmem>>, vector<8x12xbf16>
    %cst_82 = arith.constant dense<0.000000e+00> : vector<8x512xf32>
    %212 = tpu.matmul %211, %210, %cst_82 {dimension_numbers = #tpu.dot_dimension_numbers<[1], [0], [0], [1], [0, 0, 1, 1], [], []>} : vector<8x12xbf16>, vector<12x512xbf16>, vector<8x512xf32> -> vector<8x512xf32>
    %213 = vector.extract_strided_slice %209 {offsets = [0, 0], sizes = [8, 1], strides = [1, 1]} : vector<8x5xf32> to vector<8x1xf32>
    %214 = vector.broadcast %213 : vector<8x1xf32> to vector<8x512xf32>
    %215 = arith.addf %212, %214 : vector<8x512xf32>
    %cst_83 = arith.constant 0.000000e+00 : f32
    %216 = vector.broadcast %cst_83 : f32 to vector<8x512xf32>
    %217 = arith.maximumf %215, %216 : vector<8x512xf32>
    %218 = arith.truncf %217 : vector<8x512xf32> to vector<8x512xbf16>
    %219 = vector.extract_strided_slice %209 {offsets = [0, 1], sizes = [8, 1], strides = [1, 1]} : vector<8x5xf32> to vector<8x1xf32>
    %c0_84 = arith.constant 0 : index
    %c0_85 = arith.constant 0 : index
    %220 = vector.load %arg9[%c0_84, %c0_85] : memref<24x8xbf16, #tpu.memory_space<vmem>>, vector<24x8xbf16>
    %cst_86 = arith.constant dense<0.000000e+00> : vector<24x512xf32>
    %221 = tpu.matmul %220, %218, %cst_86 {dimension_numbers = #tpu.dot_dimension_numbers<[1], [0], [0], [1], [0, 0, 1, 1], [], []>} : vector<24x8xbf16>, vector<8x512xbf16>, vector<24x512xf32> -> vector<24x512xf32>
    %222 = vector.extract_strided_slice %221 {offsets = [0, 0], sizes = [8, 512], strides = [1, 1]} : vector<24x512xf32> to vector<8x512xf32>
    %c16_i32_87 = arith.constant 16 : i32
    %223 = tpu.dynamic_rotate %222 by %c16_i32_87 dim 1 : vector<8x512xf32>, i32 -> vector<8x512xf32>
    %cst_88 = arith.constant 0.000000e+00 : f32
    %224 = vector.shape_cast %72 : vector<1x512xi1> to vector<1x512xi1>
    %225 = vector.broadcast %224 : vector<1x512xi1> to vector<8x512xi1>
    %226 = vector.broadcast %cst_88 : f32 to vector<8x512xf32>
    %227 = arith.select %225, %223, %226 : vector<8x512xi1>, vector<8x512xf32>
    %228 = vector.extract_strided_slice %221 {offsets = [8, 0], sizes = [8, 512], strides = [1, 1]} : vector<24x512xf32> to vector<8x512xf32>
    %229 = arith.addf %227, %228 : vector<8x512xf32>
    %230 = vector.extract_strided_slice %221 {offsets = [16, 0], sizes = [8, 512], strides = [1, 1]} : vector<24x512xf32> to vector<8x512xf32>
    %c496_i32_89 = arith.constant 496 : i32
    %231 = tpu.dynamic_rotate %230 by %c496_i32_89 dim 1 : vector<8x512xf32>, i32 -> vector<8x512xf32>
    %cst_90 = arith.constant 0.000000e+00 : f32
    %232 = vector.shape_cast %63 : vector<1x512xi1> to vector<1x512xi1>
    %233 = vector.broadcast %232 : vector<1x512xi1> to vector<8x512xi1>
    %234 = vector.broadcast %cst_90 : f32 to vector<8x512xf32>
    %235 = arith.select %233, %231, %234 : vector<8x512xi1>, vector<8x512xf32>
    %236 = arith.addf %229, %235 : vector<8x512xf32>
    %237 = vector.broadcast %219 : vector<8x1xf32> to vector<8x512xf32>
    %238 = arith.addf %236, %237 : vector<8x512xf32>
    %239 = arith.truncf %238 : vector<8x512xf32> to vector<8x512xbf16>
    %240 = vector.extract_strided_slice %209 {offsets = [0, 2], sizes = [8, 1], strides = [1, 1]} : vector<8x5xf32> to vector<8x1xf32>
    %c0_91 = arith.constant 0 : index
    %c0_92 = arith.constant 0 : index
    %241 = vector.load %arg10[%c0_91, %c0_92] : memref<24x8xbf16, #tpu.memory_space<vmem>>, vector<24x8xbf16>
    %cst_93 = arith.constant dense<0.000000e+00> : vector<24x512xf32>
    %242 = tpu.matmul %241, %239, %cst_93 {dimension_numbers = #tpu.dot_dimension_numbers<[1], [0], [0], [1], [0, 0, 1, 1], [], []>} : vector<24x8xbf16>, vector<8x512xbf16>, vector<24x512xf32> -> vector<24x512xf32>
    %243 = vector.extract_strided_slice %242 {offsets = [0, 0], sizes = [8, 512], strides = [1, 1]} : vector<24x512xf32> to vector<8x512xf32>
    %c1_i32_94 = arith.constant 1 : i32
    %244 = tpu.dynamic_rotate %243 by %c1_i32_94 dim 1 : vector<8x512xf32>, i32 -> vector<8x512xf32>
    %cst_95 = arith.constant 0.000000e+00 : f32
    %245 = vector.shape_cast %54 : vector<1x512xi1> to vector<1x512xi1>
    %246 = vector.broadcast %245 : vector<1x512xi1> to vector<8x512xi1>
    %247 = vector.broadcast %cst_95 : f32 to vector<8x512xf32>
    %248 = arith.select %246, %244, %247 : vector<8x512xi1>, vector<8x512xf32>
    %249 = vector.extract_strided_slice %242 {offsets = [8, 0], sizes = [8, 512], strides = [1, 1]} : vector<24x512xf32> to vector<8x512xf32>
    %250 = arith.addf %248, %249 : vector<8x512xf32>
    %251 = vector.extract_strided_slice %242 {offsets = [16, 0], sizes = [8, 512], strides = [1, 1]} : vector<24x512xf32> to vector<8x512xf32>
    %c511_i32_96 = arith.constant 511 : i32
    %252 = tpu.dynamic_rotate %251 by %c511_i32_96 dim 1 : vector<8x512xf32>, i32 -> vector<8x512xf32>
    %cst_97 = arith.constant 0.000000e+00 : f32
    %253 = vector.shape_cast %45 : vector<1x512xi1> to vector<1x512xi1>
    %254 = vector.broadcast %253 : vector<1x512xi1> to vector<8x512xi1>
    %255 = vector.broadcast %cst_97 : f32 to vector<8x512xf32>
    %256 = arith.select %254, %252, %255 : vector<8x512xi1>, vector<8x512xf32>
    %257 = arith.addf %250, %256 : vector<8x512xf32>
    %258 = vector.broadcast %240 : vector<8x1xf32> to vector<8x512xf32>
    %259 = arith.addf %257, %258 : vector<8x512xf32>
    %cst_98 = arith.constant 0.000000e+00 : f32
    %260 = vector.broadcast %cst_98 : f32 to vector<8x512xf32>
    %261 = arith.maximumf %259, %260 : vector<8x512xf32>
    %262 = arith.truncf %261 : vector<8x512xf32> to vector<8x512xbf16>
    %263 = vector.extract_strided_slice %209 {offsets = [0, 3], sizes = [8, 1], strides = [1, 1]} : vector<8x5xf32> to vector<8x1xf32>
    %c0_99 = arith.constant 0 : index
    %c0_100 = arith.constant 0 : index
    %264 = vector.load %arg11[%c0_99, %c0_100] : memref<24x8xbf16, #tpu.memory_space<vmem>>, vector<24x8xbf16>
    %cst_101 = arith.constant dense<0.000000e+00> : vector<24x512xf32>
    %265 = tpu.matmul %264, %262, %cst_101 {dimension_numbers = #tpu.dot_dimension_numbers<[1], [0], [0], [1], [0, 0, 1, 1], [], []>} : vector<24x8xbf16>, vector<8x512xbf16>, vector<24x512xf32> -> vector<24x512xf32>
    %266 = vector.extract_strided_slice %265 {offsets = [0, 0], sizes = [8, 512], strides = [1, 1]} : vector<24x512xf32> to vector<8x512xf32>
    %c32_i32_102 = arith.constant 32 : i32
    %267 = tpu.dynamic_rotate %266 by %c32_i32_102 dim 1 : vector<8x512xf32>, i32 -> vector<8x512xf32>
    %cst_103 = arith.constant 0.000000e+00 : f32
    %268 = vector.shape_cast %108 : vector<1x512xi1> to vector<1x512xi1>
    %269 = vector.broadcast %268 : vector<1x512xi1> to vector<8x512xi1>
    %270 = vector.broadcast %cst_103 : f32 to vector<8x512xf32>
    %271 = arith.select %269, %267, %270 : vector<8x512xi1>, vector<8x512xf32>
    %272 = vector.extract_strided_slice %265 {offsets = [8, 0], sizes = [8, 512], strides = [1, 1]} : vector<24x512xf32> to vector<8x512xf32>
    %273 = arith.addf %271, %272 : vector<8x512xf32>
    %274 = vector.extract_strided_slice %265 {offsets = [16, 0], sizes = [8, 512], strides = [1, 1]} : vector<24x512xf32> to vector<8x512xf32>
    %c480_i32 = arith.constant 480 : i32
    %275 = tpu.dynamic_rotate %274 by %c480_i32 dim 1 : vector<8x512xf32>, i32 -> vector<8x512xf32>
    %cst_104 = arith.constant 0.000000e+00 : f32
    %276 = vector.shape_cast %99 : vector<1x512xi1> to vector<1x512xi1>
    %277 = vector.broadcast %276 : vector<1x512xi1> to vector<8x512xi1>
    %278 = vector.broadcast %cst_104 : f32 to vector<8x512xf32>
    %279 = arith.select %277, %275, %278 : vector<8x512xi1>, vector<8x512xf32>
    %280 = arith.addf %273, %279 : vector<8x512xf32>
    %281 = vector.broadcast %263 : vector<8x1xf32> to vector<8x512xf32>
    %282 = arith.addf %280, %281 : vector<8x512xf32>
    %283 = arith.truncf %282 : vector<8x512xf32> to vector<8x512xbf16>
    %284 = vector.extract_strided_slice %209 {offsets = [0, 4], sizes = [8, 1], strides = [1, 1]} : vector<8x5xf32> to vector<8x1xf32>
    %c0_105 = arith.constant 0 : index
    %c0_106 = arith.constant 0 : index
    %285 = vector.load %arg12[%c0_105, %c0_106] : memref<24x8xbf16, #tpu.memory_space<vmem>>, vector<24x8xbf16>
    %cst_107 = arith.constant dense<0.000000e+00> : vector<24x512xf32>
    %286 = tpu.matmul %285, %283, %cst_107 {dimension_numbers = #tpu.dot_dimension_numbers<[1], [0], [0], [1], [0, 0, 1, 1], [], []>} : vector<24x8xbf16>, vector<8x512xbf16>, vector<24x512xf32> -> vector<24x512xf32>
    %287 = vector.extract_strided_slice %286 {offsets = [0, 0], sizes = [8, 512], strides = [1, 1]} : vector<24x512xf32> to vector<8x512xf32>
    %c2_i32_108 = arith.constant 2 : i32
    %288 = tpu.dynamic_rotate %287 by %c2_i32_108 dim 1 : vector<8x512xf32>, i32 -> vector<8x512xf32>
    %cst_109 = arith.constant 0.000000e+00 : f32
    %289 = vector.shape_cast %90 : vector<1x512xi1> to vector<1x512xi1>
    %290 = vector.broadcast %289 : vector<1x512xi1> to vector<8x512xi1>
    %291 = vector.broadcast %cst_109 : f32 to vector<8x512xf32>
    %292 = arith.select %290, %288, %291 : vector<8x512xi1>, vector<8x512xf32>
    %293 = vector.extract_strided_slice %286 {offsets = [8, 0], sizes = [8, 512], strides = [1, 1]} : vector<24x512xf32> to vector<8x512xf32>
    %294 = arith.addf %292, %293 : vector<8x512xf32>
    %295 = vector.extract_strided_slice %286 {offsets = [16, 0], sizes = [8, 512], strides = [1, 1]} : vector<24x512xf32> to vector<8x512xf32>
    %c510_i32 = arith.constant 510 : i32
    %296 = tpu.dynamic_rotate %295 by %c510_i32 dim 1 : vector<8x512xf32>, i32 -> vector<8x512xf32>
    %cst_110 = arith.constant 0.000000e+00 : f32
    %297 = vector.shape_cast %81 : vector<1x512xi1> to vector<1x512xi1>
    %298 = vector.broadcast %297 : vector<1x512xi1> to vector<8x512xi1>
    %299 = vector.broadcast %cst_110 : f32 to vector<8x512xf32>
    %300 = arith.select %298, %296, %299 : vector<8x512xi1>, vector<8x512xf32>
    %301 = arith.addf %294, %300 : vector<8x512xf32>
    %302 = vector.broadcast %284 : vector<8x1xf32> to vector<8x512xf32>
    %303 = arith.addf %301, %302 : vector<8x512xf32>
    %cst_111 = arith.constant 0.000000e+00 : f32
    %304 = vector.broadcast %cst_111 : f32 to vector<8x512xf32>
    %305 = arith.maximumf %303, %304 : vector<8x512xf32>
    %c0_112 = arith.constant 0 : index
    %c0_113 = arith.constant 0 : index
    %306 = vector.load %arg14[%c0_112, %c0_113] : memref<20x512xf32, #tpu.memory_space<vmem>>, vector<8x512xf32>
    tpu.vector_store %arg14[%c0_112, %c0_113], %305 {strides = array<i32>} : memref<20x512xf32, #tpu.memory_space<vmem>>, vector<8x512xf32>,
    %307 = arith.truncf %305 : vector<8x512xf32> to vector<8x512xbf16>
    %c0_114 = arith.constant 0 : index
    %c0_115 = arith.constant 0 : index
    %308 = vector.load %arg15[%c0_114, %c0_115] : memref<20x512xbf16, #tpu.memory_space<vmem>>, vector<8x512xbf16>
    tpu.vector_store %arg15[%c0_114, %c0_115], %307 {strides = array<i32>} : memref<20x512xbf16, #tpu.memory_space<vmem>>, vector<8x512xbf16>,
    return
  }
  func.func @transform_0(%arg0: i32) -> (i32, i32) {
    %c0_i32 = arith.constant 0 : i32
    %c0_i32_0 = arith.constant 0 : i32
    %c0_i32_1 = arith.constant 0 : i32
    return %c0_i32, %c0_i32_0 : i32, i32
  }
  func.func @transform_1(%arg0: i32) -> (i32, i32) {
    %c0_i32 = arith.constant 0 : i32
    %c0_i32_0 = arith.constant 0 : i32
    %c0_i32_1 = arith.constant 0 : i32
    return %c0_i32, %c0_i32_0 : i32, i32
  }
  func.func @transform_2(%arg0: i32) -> (i32, i32) {
    %c0_i32 = arith.constant 0 : i32
    %c0_i32_0 = arith.constant 0 : i32
    %c0_i32_1 = arith.constant 0 : i32
    return %c0_i32, %c0_i32_0 : i32, i32
  }
  func.func @transform_3(%arg0: i32) -> (i32, i32) {
    %c0_i32 = arith.constant 0 : i32
    %c0_i32_0 = arith.constant 0 : i32
    %c0_i32_1 = arith.constant 0 : i32
    return %c0_i32, %c0_i32_0 : i32, i32
  }
  func.func @transform_4(%arg0: i32) -> (i32, i32) {
    %c0_i32 = arith.constant 0 : i32
    %c0_i32_0 = arith.constant 0 : i32
    %c0_i32_1 = arith.constant 0 : i32
    return %c0_i32, %c0_i32_0 : i32, i32
  }
  func.func @transform_5(%arg0: i32) -> (i32, i32) {
    %c0_i32 = arith.constant 0 : i32
    %c0_i32_0 = arith.constant 0 : i32
    %c0_i32_1 = arith.constant 0 : i32
    return %c0_i32, %c0_i32_0 : i32, i32
  }
  func.func @transform_6(%arg0: i32) -> (i32, i32) {
    %c0_i32 = arith.constant 0 : i32
    %c0_i32_0 = arith.constant 0 : i32
    %c0_i32_1 = arith.constant 0 : i32
    return %c0_i32, %c0_i32_0 : i32, i32
  }
  func.func @transform_7(%arg0: i32) -> (i32, i32) {
    %c0_i32 = arith.constant 0 : i32
    %c0_i32_0 = arith.constant 0 : i32
    %c0_i32_1 = arith.constant 0 : i32
    return %c0_i32, %c0_i32_0 : i32, i32
  }
  func.func @transform_8(%arg0: i32) -> (i32, i32) {
    %c0_i32 = arith.constant 0 : i32
    %c0_i32_0 = arith.constant 0 : i32
    %c0_i32_1 = arith.constant 0 : i32
    return %c0_i32, %c0_i32_0 : i32, i32
  }
  func.func @transform_9(%arg0: i32) -> (i32, i32) {
    %c0_i32 = arith.constant 0 : i32
    %c0_i32_0 = arith.constant 0 : i32
    %c0_i32_1 = arith.constant 0 : i32
    return %c0_i32, %c0_i32_0 : i32, i32
  }
  func.func @transform_10(%arg0: i32) -> (i32, i32) {
    %c0_i32 = arith.constant 0 : i32
    %c0_i32_0 = arith.constant 0 : i32
    %c0_i32_1 = arith.constant 0 : i32
    return %c0_i32, %c0_i32_0 : i32, i32
  }
  func.func @transform_11(%arg0: i32) -> (i32, i32) {
    %c0_i32 = arith.constant 0 : i32
    %c0_i32_0 = arith.constant 0 : i32
    %c0_i32_1 = arith.constant 0 : i32
    return %c0_i32, %c0_i32_0 : i32, i32
  }
  func.func @transform_12(%arg0: i32) -> (i32, i32) {
    %c0_i32 = arith.constant 0 : i32
    %c0_i32_0 = arith.constant 0 : i32
    %c0_i32_1 = arith.constant 0 : i32
    return %c0_i32, %c0_i32_0 : i32, i32
  }
  func.func @transform_13(%arg0: i32) -> (i32, i32) {
    %c0_i32 = arith.constant 0 : i32
    %c0_i32_0 = arith.constant 0 : i32
    %c0_i32_1 = arith.constant 0 : i32
    return %c0_i32, %c0_i32_0 : i32, i32
  }
}

</mosaic_0001>

<llo_original>
// kernel: tpu_custom_call.1
$region0: #{tpu_custom_call.1}
  #allocation0 [shape = 'u32[]', space=smem, size = 0x4, offset = 0x4, fixed_abs, tag = 'smem constant byte address 0x4 - core index']
  #allocation1 [shape = 'u32[144,128]{1,0:T(1,128)}', space=vmem, size = 0x12000, scoped, tag = 'internal scratch']
  #allocation2 [shape = 'bf16[20,512]{1,0:T(8,128)(2,1)}', space=vmem, size = 0x6000, scoped, tag = 'scratch operand']
  %s0 = inlined_call_operand.vmem [shape: f32[4,512], index: 0, kind: input, shape index: {}]
  %s1 = inlined_call_operand.vmem [shape: bf16[8,4], index: 1, kind: input, shape index: {}]
  %s2 = inlined_call_operand.vmem [shape: bf16[24,8], index: 2, kind: input, shape index: {}]
  %s3 = inlined_call_operand.vmem [shape: bf16[24,8], index: 3, kind: input, shape index: {}]
  %s4 = inlined_call_operand.vmem [shape: bf16[24,8], index: 4, kind: input, shape index: {}]
  %s5 = inlined_call_operand.vmem [shape: bf16[24,8], index: 5, kind: input, shape index: {}]
  %s6 = inlined_call_operand.vmem [shape: f32[8,5], index: 6, kind: input, shape index: {}]
  %s7 = inlined_call_operand.vmem [shape: bf16[8,12], index: 7, kind: input, shape index: {}]
  %s8 = inlined_call_operand.vmem [shape: bf16[24,8], index: 8, kind: input, shape index: {}]
  %s9 = inlined_call_operand.vmem [shape: bf16[24,8], index: 9, kind: input, shape index: {}]
  %s10 = inlined_call_operand.vmem [shape: bf16[24,8], index: 10, kind: input, shape index: {}]
  %s11 = inlined_call_operand.vmem [shape: bf16[24,8], index: 11, kind: input, shape index: {}]
  %s12 = inlined_call_operand.vmem [shape: f32[8,5], index: 12, kind: input, shape index: {}]
  %s13 = inlined_call_operand.hbm [shape: f32[20,512], index: 13, kind: output, shape index: {}]
  %s14 = sld [smem:[#allocation0]]
  $region62: #{tpu_custom_call.1} parent=0
    _
  %s16 = ssub.s32 1, %s14
  %s17 = scalar_select 0, %s16, %s14
  $region1: #{tpu_custom_call.1} parent=0
    #allocation3 [shape = 'u8[49152]{0}', space=vmem, size = 0xc000, scoped, tag = 'output window, operand 0, single buffered']
    #allocation4 [shape = 's32[1]{0}', space=sflag, size = 0x4, scoped, tag = 'scoped memory for tpu_custom_call.1']
    %18 = vsyncpa [#allocation4], 0
    // Predicated region
    $region2: #{tpu_custom_call.1} parent=1 // pred_check
      _
    $region3: #{tpu_custom_call.1} parent=1 // pred_check_branch
      %20 = sbr.rel (0) target = $region5
    $region4: #{tpu_custom_call.1} parent=1 // pred_region
      _
    $region5: #{tpu_custom_call.1} parent=1 // pred_fallthru
      _
    // Predicated region
    $region6: #{tpu_custom_call.1} parent=1 // pred_check
      _
    $region7: #{tpu_custom_call.1} parent=1 // pred_check_branch
      %22 = sbr.rel (0) target = $region9
    $region8: #{tpu_custom_call.1} parent=1 // pred_region
      _
    $region9: #{tpu_custom_call.1} parent=1 // pred_fallthru
      _
    // Predicated region
    $region10: #{tpu_custom_call.1} parent=1 // pred_check
      _
    $region11: #{tpu_custom_call.1} parent=1 // pred_check_branch
      %24 = sbr.rel (0) target = $region13
    $region12: #{tpu_custom_call.1} parent=1 // pred_region
      _
    $region13: #{tpu_custom_call.1} parent=1 // pred_fallthru
      _
    // Predicated region
    $region14: #{tpu_custom_call.1} parent=1 // pred_check
      _
    $region15: #{tpu_custom_call.1} parent=1 // pred_check_branch
      %26 = sbr.rel (0) target = $region17
    $region16: #{tpu_custom_call.1} parent=1 // pred_region
      _
    $region17: #{tpu_custom_call.1} parent=1 // pred_fallthru
      _
    // Predicated region
    $region18: #{tpu_custom_call.1} parent=1 // pred_check
      _
    $region19: #{tpu_custom_call.1} parent=1 // pred_check_branch
      %28 = sbr.rel (0) target = $region21
    $region20: #{tpu_custom_call.1} parent=1 // pred_region
      _
    $region21: #{tpu_custom_call.1} parent=1 // pred_fallthru
      _
    // Predicated region
    $region22: #{tpu_custom_call.1} parent=1 // pred_check
      _
    $region23: #{tpu_custom_call.1} parent=1 // pred_check_branch
      %30 = sbr.rel (0) target = $region25
    $region24: #{tpu_custom_call.1} parent=1 // pred_region
      _
    $region25: #{tpu_custom_call.1} parent=1 // pred_fallthru
      _
    // Predicated region
    $region26: #{tpu_custom_call.1} parent=1 // pred_check
      _
    $region27: #{tpu_custom_call.1} parent=1 // pred_check_branch
      %32 = sbr.rel (0) target = $region29
    $region28: #{tpu_custom_call.1} parent=1 // pred_region
      _
    $region29: #{tpu_custom_call.1} parent=1 // pred_fallthru
      _
    // Predicated region
    $region30: #{tpu_custom_call.1} parent=1 // pred_check
      _
    $region31: #{tpu_custom_call.1} parent=1 // pred_check_branch
      %34 = sbr.rel (0) target = $region33
    $region32: #{tpu_custom_call.1} parent=1 // pred_region
      _
    $region33: #{tpu_custom_call.1} parent=1 // pred_fallthru
      _
    // Predicated region
    $region34: #{tpu_custom_call.1} parent=1 // pred_check
      _
    $region35: #{tpu_custom_call.1} parent=1 // pred_check_branch
      %36 = sbr.rel (0) target = $region37
    $region36: #{tpu_custom_call.1} parent=1 // pred_region
      _
    $region37: #{tpu_custom_call.1} parent=1 // pred_fallthru
      _
    // Predicated region
    $region38: #{tpu_custom_call.1} parent=1 // pred_check
      _
    $region39: #{tpu_custom_call.1} parent=1 // pred_check_branch
      %38 = sbr.rel (0) target = $region41
    $region40: #{tpu_custom_call.1} parent=1 // pred_region
      _
    $region41: #{tpu_custom_call.1} parent=1 // pred_fallthru
      _
    // Predicated region
    $region42: #{tpu_custom_call.1} parent=1 // pred_check
      _
    $region43: #{tpu_custom_call.1} parent=1 // pred_check_branch
      %40 = sbr.rel (0) target = $region45
    $region44: #{tpu_custom_call.1} parent=1 // pred_region
      _
    $region45: #{tpu_custom_call.1} parent=1 // pred_fallthru
      _
    // Predicated region
    $region46: #{tpu_custom_call.1} parent=1 // pred_check
      _
    $region47: #{tpu_custom_call.1} parent=1 // pred_check_branch
      %42 = sbr.rel (0) target = $region49
    $region48: #{tpu_custom_call.1} parent=1 // pred_region
      _
    $region49: #{tpu_custom_call.1} parent=1 // pred_fallthru
      _
    // Predicated region
    $region50: #{tpu_custom_call.1} parent=1 // pred_check
      _
    $region51: #{tpu_custom_call.1} parent=1 // pred_check_branch
      %44 = sbr.rel (0) target = $region53
    $region52: #{tpu_custom_call.1} parent=1 // pred_region
      _
    $region53: #{tpu_custom_call.1} parent=1 // pred_fallthru
      _
    %v46 = vld [vmem:[%s0] sm:$0xff]
    %v47 = vld [vmem:[%s0 + $0x8] sm:$0xff]
    %v50 = vcombine.high %v46, %v46
    %v51 = vcombine.high %v47, %v47
    %54 = vst [vmem:[#allocation3 + $0x40] sm:$0xf] %v46
    %55 = vst [vmem:[#allocation3 + $0x48] sm:$0xf] %v50
    %56 = vst [vmem:[#allocation3 + $0x50] sm:$0xf] %v47
    %57 = vst [vmem:[#allocation3 + $0x58] sm:$0xf] %v51
    %v58 = vpack.c.bf16 %v46, %v46
    %v59 = vpack.c.bf16 %v50, %v50
    %v60 = vpack.c.bf16 %v47, %v47
    %v61 = vpack.c.bf16 %v51, %v51
    %v66 = vunpack.c.l.b16 %v58
    %v67 = vunpack.c.l.b16 %v59
    %v68 = vunpack.c.l.b16 %v60
    %v69 = vunpack.c.l.b16 %v61
    %v70 = vpack.c.b16 %v67, %v66
    %v71 = vpack.c.b16 %v69, %v68
    %74 = vst [vmem:[#allocation2 + $0x20] sm:$0x33] %v70
    %75 = vst [vmem:[#allocation2 + $0x28] sm:$0x33] %v71
    %v76 = vlaneseq
    %v77 = vand.u32 %v76, 127
    %v78 = vadd.s32 %v77, 128
    %v79 = vadd.s32 %v77, 256
    %v80 = vadd.s32 %v77, 384
    %vm81 = vcmp.lt.s32.totalorder %v77, 0
    %v82 = vsub.s32 0, %v77
    %v83 = vsel %vm81, %v82, %v77
    %v84 = vshrl.u32 %v83, 4
    %v85 = vand.u32 %v83, 15
    %v86 = vsub.s32 0, %v85
    %v87 = vsel %vm81, %v86, %v85
    %vm88 = vcmp.lt.s32.totalorder %v78, 0
    %v89 = vsub.s32 0, %v78
    %v90 = vsel %vm88, %v89, %v78
    %v91 = vshrl.u32 %v90, 4
    %v92 = vand.u32 %v90, 15
    %v93 = vsub.s32 0, %v92
    %v94 = vsel %vm88, %v93, %v92
    %vm95 = vcmp.lt.s32.totalorder %v79, 0
    %v96 = vsub.s32 0, %v79
    %v97 = vsel %vm95, %v96, %v79
    %v98 = vshrl.u32 %v97, 4
    %v99 = vand.u32 %v97, 15
    %v100 = vsub.s32 0, %v99
    %v101 = vsel %vm95, %v100, %v99
    %vm102 = vcmp.lt.s32.totalorder %v80, 0
    %v103 = vsub.s32 0, %v80
    %v104 = vsel %vm102, %v103, %v80
    %v105 = vshrl.u32 %v104, 4
    %v106 = vand.u32 %v104, 15
    %v107 = vsub.s32 0, %v106
    %v108 = vsel %vm102, %v107, %v106
    %vm109 = vcmp.ne.s32.totalorder %v87, 0
    %vm110 = vcmp.ne.s32.totalorder %v94, 0
    %vm111 = vcmp.ne.s32.totalorder %v101, 0
    %vm112 = vcmp.ne.s32.totalorder %v108, 0
    %vm113 = vcmp.lt.s32.totalorder %v87, 0
    %vm114 = vcmp.lt.s32.totalorder %v94, 0
    %vm115 = vcmp.lt.s32.totalorder %v101, 0
    %vm116 = vcmp.lt.s32.totalorder %v108, 0
    %vm117 = vmand %vm113, %vm109
    %vm118 = vmand %vm114, %vm110
    %vm119 = vmand %vm115, %vm111
    %vm120 = vmand %vm116, %vm112
    %v121 = vadd.s32 %v87, 16
    %v122 = vadd.s32 %v94, 16
    %v123 = vadd.s32 %v101, 16
    %v124 = vadd.s32 %v108, 16
    %v125 = vsel %vm117, %v121, %v87
    %v126 = vsel %vm118, %v122, %v94
    %v127 = vsel %vm119, %v123, %v101
    %v128 = vsel %vm120, %v124, %v108
    %vm129 = vcmp.lt.s32.totalorder %v77, 0
    %v130 = vsub.s32 0, %v77
    %v131 = vsel %vm129, %v130, %v77
    %v132 = vshrl.u32 %v131, 8
    %v133 = vand.u32 %v131, 255
    %v134 = vsub.s32 0, %v133
    %v135 = vsel %vm129, %v134, %v133
    %vm136 = vcmp.lt.s32.totalorder %v78, 0
    %v137 = vsub.s32 0, %v78
    %v138 = vsel %vm136, %v137, %v78
    %v139 = vshrl.u32 %v138, 8
    %v140 = vand.u32 %v138, 255
    %v141 = vsub.s32 0, %v140
    %v142 = vsel %vm136, %v141, %v140
    %vm143 = vcmp.lt.s32.totalorder %v79, 0
    %v144 = vsub.s32 0, %v79
    %v145 = vsel %vm143, %v144, %v79
    %v146 = vshrl.u32 %v145, 8
    %v147 = vand.u32 %v145, 255
    %v148 = vsub.s32 0, %v147
    %v149 = vsel %vm143, %v148, %v147
    %vm150 = vcmp.lt.s32.totalorder %v80, 0
    %v151 = vsub.s32 0, %v80
    %v152 = vsel %vm150, %v151, %v80
    %v153 = vshrl.u32 %v152, 8
    %v154 = vand.u32 %v152, 255
    %v155 = vsub.s32 0, %v154
    %v156 = vsel %vm150, %v155, %v154
    %vm157 = vcmp.ne.s32.totalorder %v135, 0
    %vm158 = vcmp.ne.s32.totalorder %v142, 0
    %vm159 = vcmp.ne.s32.totalorder %v149, 0
    %vm160 = vcmp.ne.s32.totalorder %v156, 0
    %vm161 = vcmp.lt.s32.totalorder %v135, 0
    %vm162 = vcmp.lt.s32.totalorder %v142, 0
    %vm163 = vcmp.lt.s32.totalorder %v149, 0
    %vm164 = vcmp.lt.s32.totalorder %v156, 0
    %vm165 = vmand %vm161, %vm157
    %vm166 = vmand %vm162, %vm158
    %vm167 = vmand %vm163, %vm159
    %vm168 = vmand %vm164, %vm160
    %v169 = vadd.s32 %v135, 256
    %v170 = vadd.s32 %v142, 256
    %v171 = vadd.s32 %v149, 256
    %v172 = vadd.s32 %v156, 256
    %v173 = vsel %vm165, %v169, %v135
    %v174 = vsel %vm166, %v170, %v142
    %v175 = vsel %vm167, %v171, %v149
    %v176 = vsel %vm168, %v172, %v156
    %v177 = vadd.s32 %v125, 1
    %v178 = vadd.s32 %v126, 1
    %v179 = vadd.s32 %v127, 1
    %v180 = vadd.s32 %v128, 1
    %vm181 = vcmp.ge.s32.totalorder %v177, 0
    %vm182 = vcmp.ge.s32.totalorder %v178, 0
    %vm183 = vcmp.ge.s32.totalorder %v179, 0
    %vm184 = vcmp.ge.s32.totalorder %v180, 0
    %vm185 = vcmp.lt.s32.totalorder %v177, 16
    %vm186 = vcmp.lt.s32.totalorder %v178, 16
    %vm187 = vcmp.lt.s32.totalorder %v179, 16
    %vm188 = vcmp.lt.s32.totalorder %v180, 16
    %vm189 = vmand %vm181, %vm185
    %vm190 = vmand %vm182, %vm186
    %vm191 = vmand %vm183, %vm187
    %vm192 = vmand %vm184, %vm188
    %v193 = vadd.s32 %v125, 4294967295
    %v194 = vadd.s32 %v126, 4294967295
    %v195 = vadd.s32 %v127, 4294967295
    %v196 = vadd.s32 %v128, 4294967295
    %vm197 = vcmp.ge.s32.totalorder %v193, 0
    %vm198 = vcmp.ge.s32.totalorder %v194, 0
    %vm199 = vcmp.ge.s32.totalorder %v195, 0
    %vm200 = vcmp.ge.s32.totalorder %v196, 0
    %vm201 = vcmp.lt.s32.totalorder %v193, 16
    %vm202 = vcmp.lt.s32.totalorder %v194, 16
    %vm203 = vcmp.lt.s32.totalorder %v195, 16
    %vm204 = vcmp.lt.s32.totalorder %v196, 16
    %vm205 = vmand %vm197, %vm201
    %vm206 = vmand %vm198, %vm202
    %vm207 = vmand %vm199, %vm203
    %vm208 = vmand %vm200, %vm204
    %v209 = vadd.s32 %v173, 16
    %v210 = vadd.s32 %v174, 16
    %v211 = vadd.s32 %v175, 16
    %v212 = vadd.s32 %v176, 16
    %vm213 = vcmp.ge.s32.totalorder %v209, 0
    %vm214 = vcmp.ge.s32.totalorder %v210, 0
    %vm215 = vcmp.ge.s32.totalorder %v211, 0
    %vm216 = vcmp.ge.s32.totalorder %v212, 0
    %vm217 = vcmp.lt.s32.totalorder %v209, 256
    %vm218 = vcmp.lt.s32.totalorder %v210, 256
    %vm219 = vcmp.lt.s32.totalorder %v211, 256
    %vm220 = vcmp.lt.s32.totalorder %v212, 256
    %vm221 = vmand %vm213, %vm217
    %vm222 = vmand %vm214, %vm218
    %vm223 = vmand %vm215, %vm219
    %vm224 = vmand %vm216, %vm220
    %v225 = vadd.s32 %v173, 4294967280
    %v226 = vadd.s32 %v174, 4294967280
    %v227 = vadd.s32 %v175, 4294967280
    %v228 = vadd.s32 %v176, 4294967280
    %vm229 = vcmp.ge.s32.totalorder %v225, 0
    %vm230 = vcmp.ge.s32.totalorder %v226, 0
    %vm231 = vcmp.ge.s32.totalorder %v227, 0
    %vm232 = vcmp.ge.s32.totalorder %v228, 0
    %vm233 = vcmp.lt.s32.totalorder %v225, 256
    %vm234 = vcmp.lt.s32.totalorder %v226, 256
    %vm235 = vcmp.lt.s32.totalorder %v227, 256
    %vm236 = vcmp.lt.s32.totalorder %v228, 256
    %vm237 = vmand %vm229, %vm233
    %vm238 = vmand %vm230, %vm234
    %vm239 = vmand %vm231, %vm235
    %vm240 = vmand %vm232, %vm236
    %v241 = vadd.s32 %v125, 2
    %v242 = vadd.s32 %v126, 2
    %v243 = vadd.s32 %v127, 2
    %v244 = vadd.s32 %v128, 2
    %vm245 = vcmp.ge.s32.totalorder %v241, 0
    %vm246 = vcmp.ge.s32.totalorder %v242, 0
    %vm247 = vcmp.ge.s32.totalorder %v243, 0
    %vm248 = vcmp.ge.s32.totalorder %v244, 0
    %vm249 = vcmp.lt.s32.totalorder %v241, 16
    %vm250 = vcmp.lt.s32.totalorder %v242, 16
    %vm251 = vcmp.lt.s32.totalorder %v243, 16
    %vm252 = vcmp.lt.s32.totalorder %v244, 16
    %vm253 = vmand %vm245, %vm249
    %vm254 = vmand %vm246, %vm250
    %vm255 = vmand %vm247, %vm251
    %vm256 = vmand %vm248, %vm252
    %v257 = vadd.s32 %v125, 4294967294
    %v258 = vadd.s32 %v126, 4294967294
    %v259 = vadd.s32 %v127, 4294967294
    %v260 = vadd.s32 %v128, 4294967294
    %vm261 = vcmp.ge.s32.totalorder %v257, 0
    %vm262 = vcmp.ge.s32.totalorder %v258, 0
    %vm263 = vcmp.ge.s32.totalorder %v259, 0
    %vm264 = vcmp.ge.s32.totalorder %v260, 0
    %vm265 = vcmp.lt.s32.totalorder %v257, 16
    %vm266 = vcmp.lt.s32.totalorder %v258, 16
    %vm267 = vcmp.lt.s32.totalorder %v259, 16
    %vm268 = vcmp.lt.s32.totalorder %v260, 16
    %vm269 = vmand %vm261, %vm265
    %vm270 = vmand %vm262, %vm266
    %vm271 = vmand %vm263, %vm267
    %vm272 = vmand %vm264, %vm268
    %v273 = vadd.s32 %v173, 32
    %v274 = vadd.s32 %v174, 32
    %v275 = vadd.s32 %v175, 32
    %v276 = vadd.s32 %v176, 32
    %vm277 = vcmp.ge.s32.totalorder %v273, 0
    %vm278 = vcmp.ge.s32.totalorder %v274, 0
    %vm279 = vcmp.ge.s32.totalorder %v275, 0
    %vm280 = vcmp.ge.s32.totalorder %v276, 0
    %vm281 = vcmp.lt.s32.totalorder %v273, 256
    %vm282 = vcmp.lt.s32.totalorder %v274, 256
    %vm283 = vcmp.lt.s32.totalorder %v275, 256
    %vm284 = vcmp.lt.s32.totalorder %v276, 256
    %vm285 = vmand %vm277, %vm281
    %vm286 = vmand %vm278, %vm282
    %vm287 = vmand %vm279, %vm283
    %vm288 = vmand %vm280, %vm284
    %v289 = vadd.s32 %v173, 4294967264
    %v290 = vadd.s32 %v174, 4294967264
    %v291 = vadd.s32 %v175, 4294967264
    %v292 = vadd.s32 %v176, 4294967264
    %vm293 = vcmp.ge.s32.totalorder %v289, 0
    %vm294 = vcmp.ge.s32.totalorder %v290, 0
    %vm295 = vcmp.ge.s32.totalorder %v291, 0
    %vm296 = vcmp.ge.s32.totalorder %v292, 0
    %vm297 = vcmp.lt.s32.totalorder %v289, 256
    %vm298 = vcmp.lt.s32.totalorder %v290, 256
    %vm299 = vcmp.lt.s32.totalorder %v291, 256
    %vm300 = vcmp.lt.s32.totalorder %v292, 256
    %vm301 = vmand %vm293, %vm297
    %vm302 = vmand %vm294, %vm298
    %vm303 = vmand %vm295, %vm299
    %vm304 = vmand %vm296, %vm300
    %v305 = vld [vmem:[%s6] sm:$0xff]
    %v306 = vld [vmem:[#allocation2 + $0x20] sm:$0x33]
    %v307 = vld [vmem:[#allocation2 + $0x28] sm:$0x33]
    %v308 = vld [vmem:[%s1] sm:$0xf]
    %310 = vset.pattern.permute.xlu0 0
    %311 = vperm.xlu0 %310, %v305
    %v312 = vpop.permute.xlu0 %311
    %v316 = vunpack.c.l.b16 %v306
    %v317 = vunpack.c.h.b16 %v306
    %v318 = vunpack.c.l.b16 %v307
    %v319 = vunpack.c.h.b16 %v307
    %v320 = vpack.c.b16 %v316, %v316
    %v321 = vpack.c.b16 %v317, %v317
    %v322 = vpack.c.b16 %v318, %v318
    %v323 = vpack.c.b16 %v319, %v319
    %vm324 = vcmask 31744
    %v326 = vsel %vm324, %v308, 0
    %vm328 = vcmask 1041408
    %v330 = vsel %vm328, %v320, 0
    %v333 = vsel %vm328, %v321, 0
    %v336 = vsel %vm328, %v322, 0
    %v339 = vsel %vm328, %v323, 0
    %341 = vmatprep.subr.bf16.mxu0 %v333
    %342 = vmatpush1.bf16.msra.mxu0 %v330
    %343 = vmatprep.subr.bf16.mxu0 0
    %344 = vmatpush1.bf16.msra.mxu0 0
    %345 = vmatprep.subr.bf16.mxu0 0
    %346 = vmatpush1.bf16.msra.mxu0 0
    %347 = vmatprep.subr.bf16.mxu0 0
    %348 = vmatpush1.bf16.msra.mxu0 0
    %349 = vmatprep.subr.bf16.mxu0 0
    %350 = vmatpush1.bf16.msra.mxu0 0
    %351 = vmatprep.subr.bf16.mxu0 0
    %352 = vmatpush1.bf16.msra.mxu0 0
    %353 = vmatprep.subr.bf16.mxu0 0
    %354 = vmatpush1.bf16.msra.mxu0 0
    %355 = vmatprep.subr.bf16.mxu0 0
    %356 = vmatpush1.bf16.msra.mxu0 0
    %357 = vmatprep.subr.bf16.mxu0 0
    %358 = vmatpush1.bf16.msra.mxu0 0
    %359 = vmatprep.subr.bf16.mxu0 0
    %360 = vmatpush1.bf16.msra.mxu0 0
    %361 = vmatprep.subr.bf16.mxu0 0
    %362 = vmatpush1.bf16.msra.mxu0 0
    %363 = vmatprep.subr.bf16.mxu0 0
    %364 = vmatpush1.bf16.msra.mxu0 0
    %365 = vmatprep.subr.bf16.mxu0 0
    %366 = vmatpush1.bf16.msra.mxu0 0
    %367 = vmatprep.subr.bf16.mxu0 0
    %368 = vmatpush1.bf16.msra.mxu0 0
    %369 = vmatprep.subr.bf16.mxu0 0
    %370 = vmatpush1.bf16.msra.mxu0 0
    %371 = vmatprep.subr.bf16.mxu0 0
    %372 = vmatpush1.bf16.msra.mxu0 0
    %373 = vmatprep.mubr.bf16.mxu0 0
    %374 = vmatmul.mubr.bf16.gmra.mrb[0].mxu0 %v326
    %v375 = vpop.f32.mrb[0].mxu0
    %v376 = vadd.f32 %v312, %v375
    %v377 = vpop.f32.mrb[0].mxu0
    %v378 = vadd.f32 %v312, %v377
    %v379 = vpop.f32.mrb[0].mxu0
    %v380 = vpop.f32.mrb[0].mxu0
    %381 = vdwg.mxu0
    %382 = vmatprep.subr.bf16.mxu0 %v339
    %383 = vmatpush1.bf16.msra.mxu0 %v336
    %384 = vmatprep.subr.bf16.mxu0 0
    %385 = vmatpush1.bf16.msra.mxu0 0
    %386 = vmatprep.subr.bf16.mxu0 0
    %387 = vmatpush1.bf16.msra.mxu0 0
    %388 = vmatprep.subr.bf16.mxu0 0
    %389 = vmatpush1.bf16.msra.mxu0 0
    %390 = vmatprep.subr.bf16.mxu0 0
    %391 = vmatpush1.bf16.msra.mxu0 0
    %392 = vmatprep.subr.bf16.mxu0 0
    %393 = vmatpush1.bf16.msra.mxu0 0
    %394 = vmatprep.subr.bf16.mxu0 0
    %395 = vmatpush1.bf16.msra.mxu0 0
    %396 = vmatprep.subr.bf16.mxu0 0
    %397 = vmatpush1.bf16.msra.mxu0 0
    %398 = vmatprep.subr.bf16.mxu0 0
    %399 = vmatpush1.bf16.msra.mxu0 0
    %400 = vmatprep.subr.bf16.mxu0 0
    %401 = vmatpush1.bf16.msra.mxu0 0
    %402 = vmatprep.subr.bf16.mxu0 0
    %403 = vmatpush1.bf16.msra.mxu0 0
    %404 = vmatprep.subr.bf16.mxu0 0
    %405 = vmatpush1.bf16.msra.mxu0 0
    %406 = vmatprep.subr.bf16.mxu0 0
    %407 = vmatpush1.bf16.msra.mxu0 0
    %408 = vmatprep.subr.bf16.mxu0 0
    %409 = vmatpush1.bf16.msra.mxu0 0
    %410 = vmatprep.subr.bf16.mxu0 0
    %411 = vmatpush1.bf16.msra.mxu0 0
    %412 = vmatprep.subr.bf16.mxu0 0
    %413 = vmatpush1.bf16.msra.mxu0 0
    %414 = vmatprep.mubr.bf16.mxu0 0
    %415 = vmatmul.mubr.bf16.gmra.mrb[0].mxu0 %v326
    %v416 = vpop.f32.mrb[0].mxu0
    %v417 = vadd.f32 %v312, %v416
    %v418 = vpop.f32.mrb[0].mxu0
    %v419 = vadd.f32 %v312, %v418
    %v420 = vpop.f32.mrb[0].mxu0
    %v421 = vpop.f32.mrb[0].mxu0
    %422 = vdwg.mxu0
    %v423 = vmax.f32 %v376, 0.0
    %v424 = vmax.f32 %v378, 0.0
    %v425 = vmax.f32 %v417, 0.0
    %v426 = vmax.f32 %v419, 0.0
    %v427 = vpack.c.bf16 %v423, %v423
    %v428 = vpack.c.bf16 %v424, %v424
    %v429 = vpack.c.bf16 %v425, %v425
    %v430 = vpack.c.bf16 %v426, %v426
    %v431 = vld [vmem:[%s2] sm:$0xf]
    %v432 = vld [vmem:[%s2 + $0x4] sm:$0xf]
    %v433 = vld [vmem:[%s2 + $0x8] sm:$0xf]
    %v437 = vunpack.c.l.b16 %v431
    %v438 = vunpack.c.l.b16 %v432
    %v439 = vunpack.c.l.b16 %v433
    %v440 = vpack.c.b16 %v438, %v437
    %v441 = vpack.c.b16 %v439, %v439
    %vm442 = vcmask 64512
    %v444 = vsel %vm442, %v440, 0
    %v447 = vsel %vm442, %v441, 0
    %vm449 = vcmask 1043456
    %v451 = vsel %vm449, %v427, 0
    %v454 = vsel %vm449, %v428, 0
    %v457 = vsel %vm449, %v429, 0
    %v460 = vsel %vm449, %v430, 0
    %462 = vmatprep.subr.bf16.mxu0 %v454
    %463 = vmatpush1.bf16.msra.mxu0 %v451
    %464 = vmatprep.subr.bf16.mxu0 0
    %465 = vmatpush1.bf16.msra.mxu0 0
    %466 = vmatprep.subr.bf16.mxu0 0
    %467 = vmatpush1.bf16.msra.mxu0 0
    %468 = vmatprep.subr.bf16.mxu0 0
    %469 = vmatpush1.bf16.msra.mxu0 0
    %470 = vmatprep.subr.bf16.mxu0 0
    %471 = vmatpush1.bf16.msra.mxu0 0
    %472 = vmatprep.subr.bf16.mxu0 0
    %473 = vmatpush1.bf16.msra.mxu0 0
    %474 = vmatprep.subr.bf16.mxu0 0
    %475 = vmatpush1.bf16.msra.mxu0 0
    %476 = vmatprep.subr.bf16.mxu0 0
    %477 = vmatpush1.bf16.msra.mxu0 0
    %478 = vmatprep.subr.bf16.mxu0 0
    %479 = vmatpush1.bf16.msra.mxu0 0
    %480 = vmatprep.subr.bf16.mxu0 0
    %481 = vmatpush1.bf16.msra.mxu0 0
    %482 = vmatprep.subr.bf16.mxu0 0
    %483 = vmatpush1.bf16.msra.mxu0 0
    %484 = vmatprep.subr.bf16.mxu0 0
    %485 = vmatpush1.bf16.msra.mxu0 0
    %486 = vmatprep.subr.bf16.mxu0 0
    %487 = vmatpush1.bf16.msra.mxu0 0
    %488 = vmatprep.subr.bf16.mxu0 0
    %489 = vmatpush1.bf16.msra.mxu0 0
    %490 = vmatprep.subr.bf16.mxu0 0
    %491 = vmatpush1.bf16.msra.mxu0 0
    %492 = vmatprep.subr.bf16.mxu0 0
    %493 = vmatpush1.bf16.msra.mxu0 0
    %494 = vmatprep.mubr.bf16.mxu0 0
    %495 = vmatmul.mubr.bf16.gmra.mrb[0].mxu0 %v444
    %v496 = vpop.f32.mrb[0].mxu0
    %v497 = vadd.f32 0.0, %v496
    %v498 = vpop.f32.mrb[0].mxu0
    %v499 = vadd.f32 0.0, %v498
    %v500 = vpop.f32.mrb[0].mxu0
    %v501 = vadd.f32 0.0, %v500
    %v502 = vpop.f32.mrb[0].mxu0
    %v503 = vadd.f32 0.0, %v502
    %504 = vmatprep.mubr.bf16.mxu0 0
    %505 = vmatmul.mubr.bf16.gmra.mrb[0].mxu0 %v447
    %v506 = vpop.f32.mrb[0].mxu0
    %v507 = vadd.f32 0.0, %v506
    %v508 = vpop.f32.mrb[0].mxu0
    %v509 = vadd.f32 0.0, %v508
    %v510 = vpop.f32.mrb[0].mxu0
    %v511 = vpop.f32.mrb[0].mxu0
    %512 = vdwg.mxu0
    %513 = vmatprep.subr.bf16.mxu0 %v460
    %514 = vmatpush1.bf16.msra.mxu0 %v457
    %515 = vmatprep.subr.bf16.mxu0 0
    %516 = vmatpush1.bf16.msra.mxu0 0
    %517 = vmatprep.subr.bf16.mxu0 0
    %518 = vmatpush1.bf16.msra.mxu0 0
    %519 = vmatprep.subr.bf16.mxu0 0
    %520 = vmatpush1.bf16.msra.mxu0 0
    %521 = vmatprep.subr.bf16.mxu0 0
    %522 = vmatpush1.bf16.msra.mxu0 0
    %523 = vmatprep.subr.bf16.mxu0 0
    %524 = vmatpush1.bf16.msra.mxu0 0
    %525 = vmatprep.subr.bf16.mxu0 0
    %526 = vmatpush1.bf16.msra.mxu0 0
    %527 = vmatprep.subr.bf16.mxu0 0
    %528 = vmatpush1.bf16.msra.mxu0 0
    %529 = vmatprep.subr.bf16.mxu0 0
    %530 = vmatpush1.bf16.msra.mxu0 0
    %531 = vmatprep.subr.bf16.mxu0 0
    %532 = vmatpush1.bf16.msra.mxu0 0
    %533 = vmatprep.subr.bf16.mxu0 0
    %534 = vmatpush1.bf16.msra.mxu0 0
    %535 = vmatprep.subr.bf16.mxu0 0
    %536 = vmatpush1.bf16.msra.mxu0 0
    %537 = vmatprep.subr.bf16.mxu0 0
    %538 = vmatpush1.bf16.msra.mxu0 0
    %539 = vmatprep.subr.bf16.mxu0 0
    %540 = vmatpush1.bf16.msra.mxu0 0
    %541 = vmatprep.subr.bf16.mxu0 0
    %542 = vmatpush1.bf16.msra.mxu0 0
    %543 = vmatprep.subr.bf16.mxu0 0
    %544 = vmatpush1.bf16.msra.mxu0 0
    %545 = vmatprep.mubr.bf16.mxu0 0
    %546 = vmatmul.mubr.bf16.gmra.mrb[0].mxu0 %v444
    %v547 = vpop.f32.mrb[0].mxu0
    %v548 = vadd.f32 0.0, %v547
    %v549 = vpop.f32.mrb[0].mxu0
    %v550 = vadd.f32 0.0, %v549
    %v551 = vpop.f32.mrb[0].mxu0
    %v552 = vadd.f32 0.0, %v551
    %v553 = vpop.f32.mrb[0].mxu0
    %v554 = vadd.f32 0.0, %v553
    %555 = vmatprep.mubr.bf16.mxu0 0
    %556 = vmatmul.mubr.bf16.gmra.mrb[0].mxu0 %v447
    %v557 = vpop.f32.mrb[0].mxu0
    %v558 = vadd.f32 0.0, %v557
    %v559 = vpop.f32.mrb[0].mxu0
    %v560 = vadd.f32 0.0, %v559
    %v561 = vpop.f32.mrb[0].mxu0
    %v562 = vpop.f32.mrb[0].mxu0
    %563 = vdwg.mxu0
    %564 = vrot.lane.b32.xlu0 %v497, 16
    %v565 = vpop.permute.xlu0 %564
    %566 = vrot.lane.b32.xlu0 %v499, 16
    %v567 = vpop.permute.xlu0 %566
    %568 = vrot.lane.b32.xlu0 %v548, 16
    %v569 = vpop.permute.xlu0 %568
    %570 = vrot.lane.b32.xlu0 %v550, 16
    %v571 = vpop.permute.xlu0 %570
    %vm572 = vcmp.lt.s32.totalorder %v77, 16
    %v573 = vsel %vm572, %v569, %v571
    %v574 = vsel %vm572, %v567, %v569
    %v575 = vsel %vm572, %v565, %v567
    %v576 = vsel %vm572, %v571, %v565
    %v577 = vsel %vm237, 1, 0
    %v578 = vsel %vm238, 1, 0
    %v579 = vsel %vm239, 1, 0
    %v580 = vsel %vm240, 1, 0
    %vm581 = vcmp.eq.s32.totalorder %v577, 1
    %vm582 = vcmp.eq.s32.totalorder %v578, 1
    %vm583 = vcmp.eq.s32.totalorder %v579, 1
    %vm584 = vcmp.eq.s32.totalorder %v580, 1
    %v585 = vsel %vm581, %v576, 0.0
    %v586 = vsel %vm582, %v575, 0.0
    %v587 = vsel %vm583, %v574, 0.0
    %v588 = vsel %vm584, %v573, 0.0
    %v589 = vadd.f32 %v585, %v501
    %v590 = vadd.f32 %v586, %v503
    %v591 = vadd.f32 %v587, %v552
    %v592 = vadd.f32 %v588, %v554
    %593 = vrot.lane.b32.xlu0 %v507, 112
    %v594 = vpop.permute.xlu0 %593
    %595 = vrot.lane.b32.xlu0 %v509, 112
    %v596 = vpop.permute.xlu0 %595
    %597 = vrot.lane.b32.xlu0 %v558, 112
    %v598 = vpop.permute.xlu0 %597
    %599 = vrot.lane.b32.xlu0 %v560, 112
    %v600 = vpop.permute.xlu0 %599
    %vm601 = vcmp.lt.s32.totalorder %v77, 112
    %v602 = vsel %vm601, %v598, %v600
    %v603 = vsel %vm601, %v596, %v598
    %v604 = vsel %vm601, %v594, %v596
    %v605 = vsel %vm601, %v600, %v594
    %v606 = vsel %vm221, 1, 0
    %v607 = vsel %vm222, 1, 0
    %v608 = vsel %vm223, 1, 0
    %v609 = vsel %vm224, 1, 0
    %vm610 = vcmp.eq.s32.totalorder %v606, 1
    %vm611 = vcmp.eq.s32.totalorder %v607, 1
    %vm612 = vcmp.eq.s32.totalorder %v608, 1
    %vm613 = vcmp.eq.s32.totalorder %v609, 1
    %v614 = vsel %vm610, %v604, 0.0
    %v615 = vsel %vm611, %v603, 0.0
    %v616 = vsel %vm612, %v602, 0.0
    %v617 = vsel %vm613, %v605, 0.0
    %v618 = vadd.f32 %v589, %v614
    %v619 = vadd.f32 %v590, %v615
    %v620 = vadd.f32 %v591, %v616
    %v621 = vadd.f32 %v592, %v617
    %622 = vset.pattern.permute.xlu0 1
    %623 = vperm.xlu0 %622, %v305
    %v624 = vpop.permute.xlu0 %623
    %v626 = vadd.f32 %v618, %v624
    %v627 = vadd.f32 %v619, %v624
    %v628 = vadd.f32 %v620, %v624
    %v629 = vadd.f32 %v621, %v624
    %v630 = vpack.c.bf16 %v626, %v626
    %v631 = vpack.c.bf16 %v627, %v627
    %v632 = vpack.c.bf16 %v628, %v628
    %v633 = vpack.c.bf16 %v629, %v629
    %v634 = vld [vmem:[%s3] sm:$0xf]
    %v635 = vld [vmem:[%s3 + $0x4] sm:$0xf]
    %v636 = vld [vmem:[%s3 + $0x8] sm:$0xf]
    %v640 = vunpack.c.l.b16 %v634
    %v641 = vunpack.c.l.b16 %v635
    %v642 = vunpack.c.l.b16 %v636
    %v643 = vpack.c.b16 %v641, %v640
    %v644 = vpack.c.b16 %v642, %v642
    %v646 = vsel %vm442, %v643, 0
    %v649 = vsel %vm442, %v644, 0
    %v652 = vsel %vm449, %v630, 0
    %v655 = vsel %vm449, %v631, 0
    %v658 = vsel %vm449, %v632, 0
    %v661 = vsel %vm449, %v633, 0
    %663 = vmatprep.subr.bf16.mxu0 %v655
    %664 = vmatpush1.bf16.msra.mxu0 %v652
    %665 = vmatprep.subr.bf16.mxu0 0
    %666 = vmatpush1.bf16.msra.mxu0 0
    %667 = vmatprep.subr.bf16.mxu0 0
    %668 = vmatpush1.bf16.msra.mxu0 0
    %669 = vmatprep.subr.bf16.mxu0 0
    %670 = vmatpush1.bf16.msra.mxu0 0
    %671 = vmatprep.subr.bf16.mxu0 0
    %672 = vmatpush1.bf16.msra.mxu0 0
    %673 = vmatprep.subr.bf16.mxu0 0
    %674 = vmatpush1.bf16.msra.mxu0 0
    %675 = vmatprep.subr.bf16.mxu0 0
    %676 = vmatpush1.bf16.msra.mxu0 0
    %677 = vmatprep.subr.bf16.mxu0 0
    %678 = vmatpush1.bf16.msra.mxu0 0
    %679 = vmatprep.subr.bf16.mxu0 0
    %680 = vmatpush1.bf16.msra.mxu0 0
    %681 = vmatprep.subr.bf16.mxu0 0
    %682 = vmatpush1.bf16.msra.mxu0 0
    %683 = vmatprep.subr.bf16.mxu0 0
    %684 = vmatpush1.bf16.msra.mxu0 0
    %685 = vmatprep.subr.bf16.mxu0 0
    %686 = vmatpush1.bf16.msra.mxu0 0
    %687 = vmatprep.subr.bf16.mxu0 0
    %688 = vmatpush1.bf16.msra.mxu0 0
    %689 = vmatprep.subr.bf16.mxu0 0
    %690 = vmatpush1.bf16.msra.mxu0 0
    %691 = vmatprep.subr.bf16.mxu0 0
    %692 = vmatpush1.bf16.msra.mxu0 0
    %693 = vmatprep.subr.bf16.mxu0 0
    %694 = vmatpush1.bf16.msra.mxu0 0
    %695 = vmatprep.mubr.bf16.mxu0 0
    %696 = vmatmul.mubr.bf16.gmra.mrb[0].mxu0 %v646
    %v697 = vpop.f32.mrb[0].mxu0
    %v698 = vadd.f32 0.0, %v697
    %v699 = vpop.f32.mrb[0].mxu0
    %v700 = vadd.f32 0.0, %v699
    %v701 = vpop.f32.mrb[0].mxu0
    %v702 = vadd.f32 0.0, %v701
    %v703 = vpop.f32.mrb[0].mxu0
    %v704 = vadd.f32 0.0, %v703
    %705 = vmatprep.mubr.bf16.mxu0 0
    %706 = vmatmul.mubr.bf16.gmra.mrb[0].mxu0 %v649
    %v707 = vpop.f32.mrb[0].mxu0
    %v708 = vadd.f32 0.0, %v707
    %v709 = vpop.f32.mrb[0].mxu0
    %v710 = vadd.f32 0.0, %v709
    %v711 = vpop.f32.mrb[0].mxu0
    %v712 = vpop.f32.mrb[0].mxu0
    %713 = vdwg.mxu0
    %714 = vmatprep.subr.bf16.mxu0 %v661
    %715 = vmatpush1.bf16.msra.mxu0 %v658
    %716 = vmatprep.subr.bf16.mxu0 0
    %717 = vmatpush1.bf16.msra.mxu0 0
    %718 = vmatprep.subr.bf16.mxu0 0
    %719 = vmatpush1.bf16.msra.mxu0 0
    %720 = vmatprep.subr.bf16.mxu0 0
    %721 = vmatpush1.bf16.msra.mxu0 0
    %722 = vmatprep.subr.bf16.mxu0 0
    %723 = vmatpush1.bf16.msra.mxu0 0
    %724 = vmatprep.subr.bf16.mxu0 0
    %725 = vmatpush1.bf16.msra.mxu0 0
    %726 = vmatprep.subr.bf16.mxu0 0
    %727 = vmatpush1.bf16.msra.mxu0 0
    %728 = vmatprep.subr.bf16.mxu0 0
    %729 = vmatpush1.bf16.msra.mxu0 0
    %730 = vmatprep.subr.bf16.mxu0 0
    %731 = vmatpush1.bf16.msra.mxu0 0
    %732 = vmatprep.subr.bf16.mxu0 0
    %733 = vmatpush1.bf16.msra.mxu0 0
    %734 = vmatprep.subr.bf16.mxu0 0
    %735 = vmatpush1.bf16.msra.mxu0 0
    %736 = vmatprep.subr.bf16.mxu0 0
    %737 = vmatpush1.bf16.msra.mxu0 0
    %738 = vmatprep.subr.bf16.mxu0 0
    %739 = vmatpush1.bf16.msra.mxu0 0
    %740 = vmatprep.subr.bf16.mxu0 0
    %741 = vmatpush1.bf16.msra.mxu0 0
    %742 = vmatprep.subr.bf16.mxu0 0
    %743 = vmatpush1.bf16.msra.mxu0 0
    %744 = vmatprep.subr.bf16.mxu0 0
    %745 = vmatpush1.bf16.msra.mxu0 0
    %746 = vmatprep.mubr.bf16.mxu0 0
    %747 = vmatmul.mubr.bf16.gmra.mrb[0].mxu0 %v646
    %v748 = vpop.f32.mrb[0].mxu0
    %v749 = vadd.f32 0.0, %v748
    %v750 = vpop.f32.mrb[0].mxu0
    %v751 = vadd.f32 0.0, %v750
    %v752 = vpop.f32.mrb[0].mxu0
    %v753 = vadd.f32 0.0, %v752
    %v754 = vpop.f32.mrb[0].mxu0
    %v755 = vadd.f32 0.0, %v754
    %756 = vmatprep.mubr.bf16.mxu0 0
    %757 = vmatmul.mubr.bf16.gmra.mrb[0].mxu0 %v649
    %v758 = vpop.f32.mrb[0].mxu0
    %v759 = vadd.f32 0.0, %v758
    %v760 = vpop.f32.mrb[0].mxu0
    %v761 = vadd.f32 0.0, %v760
    %v762 = vpop.f32.mrb[0].mxu0
    %v763 = vpop.f32.mrb[0].mxu0
    %764 = vdwg.mxu0
    %765 = vrot.lane.b32.xlu0 %v698, 1
    %v766 = vpop.permute.xlu0 %765
    %767 = vrot.lane.b32.xlu0 %v700, 1
    %v768 = vpop.permute.xlu0 %767
    %769 = vrot.lane.b32.xlu0 %v749, 1
    %v770 = vpop.permute.xlu0 %769
    %771 = vrot.lane.b32.xlu0 %v751, 1
    %v772 = vpop.permute.xlu0 %771
    %vm773 = vcmp.lt.s32.totalorder %v77, 1
    %v774 = vsel %vm773, %v770, %v772
    %v775 = vsel %vm773, %v768, %v770
    %v776 = vsel %vm773, %v766, %v768
    %v777 = vsel %vm773, %v772, %v766
    %v778 = vsel %vm205, 1, 0
    %v779 = vsel %vm206, 1, 0
    %v780 = vsel %vm207, 1, 0
    %v781 = vsel %vm208, 1, 0
    %vm782 = vcmp.eq.s32.totalorder %v778, 1
    %vm783 = vcmp.eq.s32.totalorder %v779, 1
    %vm784 = vcmp.eq.s32.totalorder %v780, 1
    %vm785 = vcmp.eq.s32.totalorder %v781, 1
    %v786 = vsel %vm782, %v777, 0.0
    %v787 = vsel %vm783, %v776, 0.0
    %v788 = vsel %vm784, %v775, 0.0
    %v789 = vsel %vm785, %v774, 0.0
    %v790 = vadd.f32 %v786, %v702
    %v791 = vadd.f32 %v787, %v704
    %v792 = vadd.f32 %v788, %v753
    %v793 = vadd.f32 %v789, %v755
    %794 = vrot.lane.b32.xlu0 %v708, 127
    %v795 = vpop.permute.xlu0 %794
    %796 = vrot.lane.b32.xlu0 %v710, 127
    %v797 = vpop.permute.xlu0 %796
    %798 = vrot.lane.b32.xlu0 %v759, 127
    %v799 = vpop.permute.xlu0 %798
    %800 = vrot.lane.b32.xlu0 %v761, 127
    %v801 = vpop.permute.xlu0 %800
    %vm802 = vcmp.lt.s32.totalorder %v77, 127
    %v803 = vsel %vm802, %v799, %v801
    %v804 = vsel %vm802, %v797, %v799
    %v805 = vsel %vm802, %v795, %v797
    %v806 = vsel %vm802, %v801, %v795
    %v807 = vsel %vm189, 1, 0
    %v808 = vsel %vm190, 1, 0
    %v809 = vsel %vm191, 1, 0
    %v810 = vsel %vm192, 1, 0
    %vm811 = vcmp.eq.s32.totalorder %v807, 1
    %vm812 = vcmp.eq.s32.totalorder %v808, 1
    %vm813 = vcmp.eq.s32.totalorder %v809, 1
    %vm814 = vcmp.eq.s32.totalorder %v810, 1
    %v815 = vsel %vm811, %v805, 0.0
    %v816 = vsel %vm812, %v804, 0.0
    %v817 = vsel %vm813, %v803, 0.0
    %v818 = vsel %vm814, %v806, 0.0
    %v819 = vadd.f32 %v790, %v815
    %v820 = vadd.f32 %v791, %v816
    %v821 = vadd.f32 %v792, %v817
    %v822 = vadd.f32 %v793, %v818
    %823 = vset.pattern.permute.xlu0 2
    %824 = vperm.xlu0 %823, %v305
    %v825 = vpop.permute.xlu0 %824
    %v827 = vadd.f32 %v819, %v825
    %v828 = vadd.f32 %v820, %v825
    %v829 = vadd.f32 %v821, %v825
    %v830 = vadd.f32 %v822, %v825
    %v831 = vmax.f32 %v827, 0.0
    %v832 = vmax.f32 %v828, 0.0
    %v833 = vmax.f32 %v829, 0.0
    %v834 = vmax.f32 %v830, 0.0
    %v835 = vpack.c.bf16 %v831, %v831
    %v836 = vpack.c.bf16 %v832, %v832
    %v837 = vpack.c.bf16 %v833, %v833
    %v838 = vpack.c.bf16 %v834, %v834
    %v839 = vld [vmem:[%s4] sm:$0xf]
    %v840 = vld [vmem:[%s4 + $0x4] sm:$0xf]
    %v841 = vld [vmem:[%s4 + $0x8] sm:$0xf]
    %v845 = vunpack.c.l.b16 %v839
    %v846 = vunpack.c.l.b16 %v840
    %v847 = vunpack.c.l.b16 %v841
    %v848 = vpack.c.b16 %v846, %v845
    %v849 = vpack.c.b16 %v847, %v847
    %v851 = vsel %vm442, %v848, 0
    %v854 = vsel %vm442, %v849, 0
    %v857 = vsel %vm449, %v835, 0
    %v860 = vsel %vm449, %v836, 0
    %v863 = vsel %vm449, %v837, 0
    %v866 = vsel %vm449, %v838, 0
    %868 = vmatprep.subr.bf16.mxu0 %v860
    %869 = vmatpush1.bf16.msra.mxu0 %v857
    %870 = vmatprep.subr.bf16.mxu0 0
    %871 = vmatpush1.bf16.msra.mxu0 0
    %872 = vmatprep.subr.bf16.mxu0 0
    %873 = vmatpush1.bf16.msra.mxu0 0
    %874 = vmatprep.subr.bf16.mxu0 0
    %875 = vmatpush1.bf16.msra.mxu0 0
    %876 = vmatprep.subr.bf16.mxu0 0
    %877 = vmatpush1.bf16.msra.mxu0 0
    %878 = vmatprep.subr.bf16.mxu0 0
    %879 = vmatpush1.bf16.msra.mxu0 0
    %880 = vmatprep.subr.bf16.mxu0 0
    %881 = vmatpush1.bf16.msra.mxu0 0
    %882 = vmatprep.subr.bf16.mxu0 0
    %883 = vmatpush1.bf16.msra.mxu0 0
    %884 = vmatprep.subr.bf16.mxu0 0
    %885 = vmatpush1.bf16.msra.mxu0 0
    %886 = vmatprep.subr.bf16.mxu0 0
    %887 = vmatpush1.bf16.msra.mxu0 0
    %888 = vmatprep.subr.bf16.mxu0 0
    %889 = vmatpush1.bf16.msra.mxu0 0
    %890 = vmatprep.subr.bf16.mxu0 0
    %891 = vmatpush1.bf16.msra.mxu0 0
    %892 = vmatprep.subr.bf16.mxu0 0
    %893 = vmatpush1.bf16.msra.mxu0 0
    %894 = vmatprep.subr.bf16.mxu0 0
    %895 = vmatpush1.bf16.msra.mxu0 0
    %896 = vmatprep.subr.bf16.mxu0 0
    %897 = vmatpush1.bf16.msra.mxu0 0
    %898 = vmatprep.subr.bf16.mxu0 0
    %899 = vmatpush1.bf16.msra.mxu0 0
    %900 = vmatprep.mubr.bf16.mxu0 0
    %901 = vmatmul.mubr.bf16.gmra.mrb[0].mxu0 %v851
    %v902 = vpop.f32.mrb[0].mxu0
    %v903 = vadd.f32 0.0, %v902
    %v904 = vpop.f32.mrb[0].mxu0
    %v905 = vadd.f32 0.0, %v904
    %v906 = vpop.f32.mrb[0].mxu0
    %v907 = vadd.f32 0.0, %v906
    %v908 = vpop.f32.mrb[0].mxu0
    %v909 = vadd.f32 0.0, %v908
    %910 = vmatprep.mubr.bf16.mxu0 0
    %911 = vmatmul.mubr.bf16.gmra.mrb[0].mxu0 %v854
    %v912 = vpop.f32.mrb[0].mxu0
    %v913 = vadd.f32 0.0, %v912
    %v914 = vpop.f32.mrb[0].mxu0
    %v915 = vadd.f32 0.0, %v914
    %v916 = vpop.f32.mrb[0].mxu0
    %v917 = vpop.f32.mrb[0].mxu0
    %918 = vdwg.mxu0
    %919 = vmatprep.subr.bf16.mxu0 %v866
    %920 = vmatpush1.bf16.msra.mxu0 %v863
    %921 = vmatprep.subr.bf16.mxu0 0
    %922 = vmatpush1.bf16.msra.mxu0 0
    %923 = vmatprep.subr.bf16.mxu0 0
    %924 = vmatpush1.bf16.msra.mxu0 0
    %925 = vmatprep.subr.bf16.mxu0 0
    %926 = vmatpush1.bf16.msra.mxu0 0
    %927 = vmatprep.subr.bf16.mxu0 0
    %928 = vmatpush1.bf16.msra.mxu0 0
    %929 = vmatprep.subr.bf16.mxu0 0
    %930 = vmatpush1.bf16.msra.mxu0 0
    %931 = vmatprep.subr.bf16.mxu0 0
    %932 = vmatpush1.bf16.msra.mxu0 0
    %933 = vmatprep.subr.bf16.mxu0 0
    %934 = vmatpush1.bf16.msra.mxu0 0
    %935 = vmatprep.subr.bf16.mxu0 0
    %936 = vmatpush1.bf16.msra.mxu0 0
    %937 = vmatprep.subr.bf16.mxu0 0
    %938 = vmatpush1.bf16.msra.mxu0 0
    %939 = vmatprep.subr.bf16.mxu0 0
    %940 = vmatpush1.bf16.msra.mxu0 0
    %941 = vmatprep.subr.bf16.mxu0 0
    %942 = vmatpush1.bf16.msra.mxu0 0
    %943 = vmatprep.subr.bf16.mxu0 0
    %944 = vmatpush1.bf16.msra.mxu0 0
    %945 = vmatprep.subr.bf16.mxu0 0
    %946 = vmatpush1.bf16.msra.mxu0 0
    %947 = vmatprep.subr.bf16.mxu0 0
    %948 = vmatpush1.bf16.msra.mxu0 0
    %949 = vmatprep.subr.bf16.mxu0 0
    %950 = vmatpush1.bf16.msra.mxu0 0
    %951 = vmatprep.mubr.bf16.mxu0 0
    %952 = vmatmul.mubr.bf16.gmra.mrb[0].mxu0 %v851
    %v953 = vpop.f32.mrb[0].mxu0
    %v954 = vadd.f32 0.0, %v953
    %v955 = vpop.f32.mrb[0].mxu0
    %v956 = vadd.f32 0.0, %v955
    %v957 = vpop.f32.mrb[0].mxu0
    %v958 = vadd.f32 0.0, %v957
    %v959 = vpop.f32.mrb[0].mxu0
    %v960 = vadd.f32 0.0, %v959
    %961 = vmatprep.mubr.bf16.mxu0 0
    %962 = vmatmul.mubr.bf16.gmra.mrb[0].mxu0 %v854
    %v963 = vpop.f32.mrb[0].mxu0
    %v964 = vadd.f32 0.0, %v963
    %v965 = vpop.f32.mrb[0].mxu0
    %v966 = vadd.f32 0.0, %v965
    %v967 = vpop.f32.mrb[0].mxu0
    %v968 = vpop.f32.mrb[0].mxu0
    %969 = vdwg.mxu0
    %970 = vrot.lane.b32.xlu0 %v903, 16
    %v971 = vpop.permute.xlu0 %970
    %972 = vrot.lane.b32.xlu0 %v905, 16
    %v973 = vpop.permute.xlu0 %972
    %974 = vrot.lane.b32.xlu0 %v954, 16
    %v975 = vpop.permute.xlu0 %974
    %976 = vrot.lane.b32.xlu0 %v956, 16
    %v977 = vpop.permute.xlu0 %976
    %v978 = vsel %vm572, %v975, %v977
    %v979 = vsel %vm572, %v973, %v975
    %v980 = vsel %vm572, %v971, %v973
    %v981 = vsel %vm572, %v977, %v971
    %v982 = vsel %vm581, %v981, 0.0
    %v983 = vsel %vm582, %v980, 0.0
    %v984 = vsel %vm583, %v979, 0.0
    %v985 = vsel %vm584, %v978, 0.0
    %v986 = vadd.f32 %v982, %v907
    %v987 = vadd.f32 %v983, %v909
    %v988 = vadd.f32 %v984, %v958
    %v989 = vadd.f32 %v985, %v960
    %990 = vrot.lane.b32.xlu0 %v913, 112
    %v991 = vpop.permute.xlu0 %990
    %992 = vrot.lane.b32.xlu0 %v915, 112
    %v993 = vpop.permute.xlu0 %992
    %994 = vrot.lane.b32.xlu0 %v964, 112
    %v995 = vpop.permute.xlu0 %994
    %996 = vrot.lane.b32.xlu0 %v966, 112
    %v997 = vpop.permute.xlu0 %996
    %v998 = vsel %vm601, %v995, %v997
    %v999 = vsel %vm601, %v993, %v995
    %v1000 = vsel %vm601, %v991, %v993
    %v1001 = vsel %vm601, %v997, %v991
    %v1002 = vsel %vm610, %v1000, 0.0
    %v1003 = vsel %vm611, %v999, 0.0
    %v1004 = vsel %vm612, %v998, 0.0
    %v1005 = vsel %vm613, %v1001, 0.0
    %v1006 = vadd.f32 %v986, %v1002
    %v1007 = vadd.f32 %v987, %v1003
    %v1008 = vadd.f32 %v988, %v1004
    %v1009 = vadd.f32 %v989, %v1005
    %1010 = vset.pattern.permute.xlu0 3
    %1011 = vperm.xlu0 %1010, %v305
    %v1012 = vpop.permute.xlu0 %1011
    %v1014 = vadd.f32 %v1006, %v1012
    %v1015 = vadd.f32 %v1007, %v1012
    %v1016 = vadd.f32 %v1008, %v1012
    %v1017 = vadd.f32 %v1009, %v1012
    %v1018 = vpack.c.bf16 %v1014, %v1014
    %v1019 = vpack.c.bf16 %v1015, %v1015
    %v1020 = vpack.c.bf16 %v1016, %v1016
    %v1021 = vpack.c.bf16 %v1017, %v1017
    %v1022 = vld [vmem:[%s5] sm:$0xf]
    %v1023 = vld [vmem:[%s5 + $0x4] sm:$0xf]
    %v1024 = vld [vmem:[%s5 + $0x8] sm:$0xf]
    %v1028 = vunpack.c.l.b16 %v1022
    %v1029 = vunpack.c.l.b16 %v1023
    %v1030 = vunpack.c.l.b16 %v1024
    %v1031 = vpack.c.b16 %v1029, %v1028
    %v1032 = vpack.c.b16 %v1030, %v1030
    %v1034 = vsel %vm442, %v1031, 0
    %v1037 = vsel %vm442, %v1032, 0
    %v1040 = vsel %vm449, %v1018, 0
    %v1043 = vsel %vm449, %v1019, 0
    %v1046 = vsel %vm449, %v1020, 0
    %v1049 = vsel %vm449, %v1021, 0
    %1051 = vmatprep.subr.bf16.mxu0 %v1043
    %1052 = vmatpush1.bf16.msra.mxu0 %v1040
    %1053 = vmatprep.subr.bf16.mxu0 0
    %1054 = vmatpush1.bf16.msra.mxu0 0
    %1055 = vmatprep.subr.bf16.mxu0 0
    %1056 = vmatpush1.bf16.msra.mxu0 0
    %1057 = vmatprep.subr.bf16.mxu0 0
    %1058 = vmatpush1.bf16.msra.mxu0 0
    %1059 = vmatprep.subr.bf16.mxu0 0
    %1060 = vmatpush1.bf16.msra.mxu0 0
    %1061 = vmatprep.subr.bf16.mxu0 0
    %1062 = vmatpush1.bf16.msra.mxu0 0
    %1063 = vmatprep.subr.bf16.mxu0 0
    %1064 = vmatpush1.bf16.msra.mxu0 0
    %1065 = vmatprep.subr.bf16.mxu0 0
    %1066 = vmatpush1.bf16.msra.mxu0 0
    %1067 = vmatprep.subr.bf16.mxu0 0
    %1068 = vmatpush1.bf16.msra.mxu0 0
    %1069 = vmatprep.subr.bf16.mxu0 0
    %1070 = vmatpush1.bf16.msra.mxu0 0
    %1071 = vmatprep.subr.bf16.mxu0 0
    %1072 = vmatpush1.bf16.msra.mxu0 0
    %1073 = vmatprep.subr.bf16.mxu0 0
    %1074 = vmatpush1.bf16.msra.mxu0 0
    %1075 = vmatprep.subr.bf16.mxu0 0
    %1076 = vmatpush1.bf16.msra.mxu0 0
    %1077 = vmatprep.subr.bf16.mxu0 0
    %1078 = vmatpush1.bf16.msra.mxu0 0
    %1079 = vmatprep.subr.bf16.mxu0 0
    %1080 = vmatpush1.bf16.msra.mxu0 0
    %1081 = vmatprep.subr.bf16.mxu0 0
    %1082 = vmatpush1.bf16.msra.mxu0 0
    %1083 = vmatprep.mubr.bf16.mxu0 0
    %1084 = vmatmul.mubr.bf16.gmra.mrb[0].mxu0 %v1034
    %v1085 = vpop.f32.mrb[0].mxu0
    %v1086 = vadd.f32 0.0, %v1085
    %v1087 = vpop.f32.mrb[0].mxu0
    %v1088 = vadd.f32 0.0, %v1087
    %v1089 = vpop.f32.mrb[0].mxu0
    %v1090 = vadd.f32 0.0, %v1089
    %v1091 = vpop.f32.mrb[0].mxu0
    %v1092 = vadd.f32 0.0, %v1091
    %1093 = vmatprep.mubr.bf16.mxu0 0
    %1094 = vmatmul.mubr.bf16.gmra.mrb[0].mxu0 %v1037
    %v1095 = vpop.f32.mrb[0].mxu0
    %v1096 = vadd.f32 0.0, %v1095
    %v1097 = vpop.f32.mrb[0].mxu0
    %v1098 = vadd.f32 0.0, %v1097
    %v1099 = vpop.f32.mrb[0].mxu0
    %v1100 = vpop.f32.mrb[0].mxu0
    %1101 = vdwg.mxu0
    %1102 = vmatprep.subr.bf16.mxu0 %v1049
    %1103 = vmatpush1.bf16.msra.mxu0 %v1046
    %1104 = vmatprep.subr.bf16.mxu0 0
    %1105 = vmatpush1.bf16.msra.mxu0 0
    %1106 = vmatprep.subr.bf16.mxu0 0
    %1107 = vmatpush1.bf16.msra.mxu0 0
    %1108 = vmatprep.subr.bf16.mxu0 0
    %1109 = vmatpush1.bf16.msra.mxu0 0
    %1110 = vmatprep.subr.bf16.mxu0 0
    %1111 = vmatpush1.bf16.msra.mxu0 0
    %1112 = vmatprep.subr.bf16.mxu0 0
    %1113 = vmatpush1.bf16.msra.mxu0 0
    %1114 = vmatprep.subr.bf16.mxu0 0
    %1115 = vmatpush1.bf16.msra.mxu0 0
    %1116 = vmatprep.subr.bf16.mxu0 0
    %1117 = vmatpush1.bf16.msra.mxu0 0
    %1118 = vmatprep.subr.bf16.mxu0 0
    %1119 = vmatpush1.bf16.msra.mxu0 0
    %1120 = vmatprep.subr.bf16.mxu0 0
    %1121 = vmatpush1.bf16.msra.mxu0 0
    %1122 = vmatprep.subr.bf16.mxu0 0
    %1123 = vmatpush1.bf16.msra.mxu0 0
    %1124 = vmatprep.subr.bf16.mxu0 0
    %1125 = vmatpush1.bf16.msra.mxu0 0
    %1126 = vmatprep.subr.bf16.mxu0 0
    %1127 = vmatpush1.bf16.msra.mxu0 0
    %1128 = vmatprep.subr.bf16.mxu0 0
    %1129 = vmatpush1.bf16.msra.mxu0 0
    %1130 = vmatprep.subr.bf16.mxu0 0
    %1131 = vmatpush1.bf16.msra.mxu0 0
    %1132 = vmatprep.subr.bf16.mxu0 0
    %1133 = vmatpush1.bf16.msra.mxu0 0
    %1134 = vmatprep.mubr.bf16.mxu0 0
    %1135 = vmatmul.mubr.bf16.gmra.mrb[0].mxu0 %v1034
    %v1136 = vpop.f32.mrb[0].mxu0
    %v1137 = vadd.f32 0.0, %v1136
    %v1138 = vpop.f32.mrb[0].mxu0
    %v1139 = vadd.f32 0.0, %v1138
    %v1140 = vpop.f32.mrb[0].mxu0
    %v1141 = vadd.f32 0.0, %v1140
    %v1142 = vpop.f32.mrb[0].mxu0
    %v1143 = vadd.f32 0.0, %v1142
    %1144 = vmatprep.mubr.bf16.mxu0 0
    %1145 = vmatmul.mubr.bf16.gmra.mrb[0].mxu0 %v1037
    %v1146 = vpop.f32.mrb[0].mxu0
    %v1147 = vadd.f32 0.0, %v1146
    %v1148 = vpop.f32.mrb[0].mxu0
    %v1149 = vadd.f32 0.0, %v1148
    %v1150 = vpop.f32.mrb[0].mxu0
    %v1151 = vpop.f32.mrb[0].mxu0
    %1152 = vdwg.mxu0
    %1153 = vrot.lane.b32.xlu0 %v1086, 1
    %v1154 = vpop.permute.xlu0 %1153
    %1155 = vrot.lane.b32.xlu0 %v1088, 1
    %v1156 = vpop.permute.xlu0 %1155
    %1157 = vrot.lane.b32.xlu0 %v1137, 1
    %v1158 = vpop.permute.xlu0 %1157
    %1159 = vrot.lane.b32.xlu0 %v1139, 1
    %v1160 = vpop.permute.xlu0 %1159
    %v1161 = vsel %vm773, %v1158, %v1160
    %v1162 = vsel %vm773, %v1156, %v1158
    %v1163 = vsel %vm773, %v1154, %v1156
    %v1164 = vsel %vm773, %v1160, %v1154
    %v1165 = vsel %vm782, %v1164, 0.0
    %v1166 = vsel %vm783, %v1163, 0.0
    %v1167 = vsel %vm784, %v1162, 0.0
    %v1168 = vsel %vm785, %v1161, 0.0
    %v1169 = vadd.f32 %v1165, %v1090
    %v1170 = vadd.f32 %v1166, %v1092
    %v1171 = vadd.f32 %v1167, %v1141
    %v1172 = vadd.f32 %v1168, %v1143
    %1173 = vrot.lane.b32.xlu0 %v1096, 127
    %v1174 = vpop.permute.xlu0 %1173
    %1175 = vrot.lane.b32.xlu0 %v1098, 127
    %v1176 = vpop.permute.xlu0 %1175
    %1177 = vrot.lane.b32.xlu0 %v1147, 127
    %v1178 = vpop.permute.xlu0 %1177
    %1179 = vrot.lane.b32.xlu0 %v1149, 127
    %v1180 = vpop.permute.xlu0 %1179
    %v1181 = vsel %vm802, %v1178, %v1180
    %v1182 = vsel %vm802, %v1176, %v1178
    %v1183 = vsel %vm802, %v1174, %v1176
    %v1184 = vsel %vm802, %v1180, %v1174
    %v1185 = vsel %vm811, %v1183, 0.0
    %v1186 = vsel %vm812, %v1182, 0.0
    %v1187 = vsel %vm813, %v1181, 0.0
    %v1188 = vsel %vm814, %v1184, 0.0
    %v1189 = vadd.f32 %v1169, %v1185
    %v1190 = vadd.f32 %v1170, %v1186
    %v1191 = vadd.f32 %v1171, %v1187
    %v1192 = vadd.f32 %v1172, %v1188
    %1193 = vset.pattern.permute.xlu0 4
    %1194 = vperm.xlu0 %1193, %v305
    %v1195 = vpop.permute.xlu0 %1194
    %v1197 = vadd.f32 %v1189, %v1195
    %v1198 = vadd.f32 %v1190, %v1195
    %v1199 = vadd.f32 %v1191, %v1195
    %v1200 = vadd.f32 %v1192, %v1195
    %v1201 = vmax.f32 %v1197, 0.0
    %v1202 = vmax.f32 %v1198, 0.0
    %v1203 = vmax.f32 %v1199, 0.0
    %v1204 = vmax.f32 %v1200, 0.0
    %1205 = vst [vmem:[#allocation3 + $0x20] sm:$0xff] %v1201
    %1206 = vst [vmem:[#allocation3 + $0x28] sm:$0xff] %v1202
    %1207 = vst [vmem:[#allocation3 + $0x30] sm:$0xff] %v1203
    %1208 = vst [vmem:[#allocation3 + $0x38] sm:$0xff] %v1204
    %v1209 = vpack.c.bf16 %v1201, %v1201
    %v1210 = vpack.c.bf16 %v1202, %v1202
    %v1211 = vpack.c.bf16 %v1203, %v1203
    %v1212 = vpack.c.bf16 %v1204, %v1204
    %v1217 = vunpack.c.l.b16 %v1209
    %v1218 = vunpack.c.l.b16 %v1210
    %v1219 = vunpack.c.l.b16 %v1211
    %v1220 = vunpack.c.l.b16 %v1212
    %v1221 = vpack.c.b16 %v1218, %v1217
    %v1222 = vpack.c.b16 %v1220, %v1219
    %1225 = vst [vmem:[#allocation2 + $0x10] sm:$0xff] %v1221
    %1226 = vst [vmem:[#allocation2 + $0x18] sm:$0xff] %v1222
    %v1227 = vld [vmem:[%s12] sm:$0xff]
    %v1228 = vld [vmem:[#allocation2 + $0x10] sm:$0xff]
    %v1229 = vld [vmem:[#allocation2 + $0x18] sm:$0xff]
    %v1230 = vld [vmem:[#allocation2 + $0x20] sm:$0x33]
    %v1231 = vld [vmem:[#allocation2 + $0x28] sm:$0x33]
    %v1232 = vld [vmem:[%s7] sm:$0xf]
    %1234 = vset.pattern.permute.xlu0 0
    %1235 = vperm.xlu0 %1234, %v1227
    %v1236 = vpop.permute.xlu0 %1235
    %v1242 = vunpack.c.l.b16 %v1228
    %v1243 = vunpack.c.h.b16 %v1228
    %v1244 = vunpack.c.l.b16 %v1229
    %v1245 = vunpack.c.h.b16 %v1229
    %v1246 = vunpack.c.l.b16 %v1230
    %v1247 = vunpack.c.h.b16 %v1230
    %v1248 = vunpack.c.l.b16 %v1231
    %v1249 = vunpack.c.h.b16 %v1231
    %v1250 = vpack.c.b16 %v1246, %v1242
    %v1251 = vpack.c.b16 %v1247, %v1243
    %v1252 = vpack.c.b16 %v1248, %v1244
    %v1253 = vpack.c.b16 %v1249, %v1245
    %vm1254 = vcmask 97280
    %v1256 = vsel %vm1254, %v1232, 0
    %vm1258 = vcmask 1045504
    %v1260 = vsel %vm1258, %v1250, 0
    %v1263 = vsel %vm1258, %v1251, 0
    %v1266 = vsel %vm1258, %v1252, 0
    %v1269 = vsel %vm1258, %v1253, 0
    %1271 = vmatprep.subr.bf16.mxu0 %v1263
    %1272 = vmatpush1.bf16.msra.mxu0 %v1260
    %1273 = vmatprep.subr.bf16.mxu0 0
    %1274 = vmatpush1.bf16.msra.mxu0 0
    %1275 = vmatprep.subr.bf16.mxu0 0
    %1276 = vmatpush1.bf16.msra.mxu0 0
    %1277 = vmatprep.subr.bf16.mxu0 0
    %1278 = vmatpush1.bf16.msra.mxu0 0
    %1279 = vmatprep.subr.bf16.mxu0 0
    %1280 = vmatpush1.bf16.msra.mxu0 0
    %1281 = vmatprep.subr.bf16.mxu0 0
    %1282 = vmatpush1.bf16.msra.mxu0 0
    %1283 = vmatprep.subr.bf16.mxu0 0
    %1284 = vmatpush1.bf16.msra.mxu0 0
    %1285 = vmatprep.subr.bf16.mxu0 0
    %1286 = vmatpush1.bf16.msra.mxu0 0
    %1287 = vmatprep.subr.bf16.mxu0 0
    %1288 = vmatpush1.bf16.msra.mxu0 0
    %1289 = vmatprep.subr.bf16.mxu0 0
    %1290 = vmatpush1.bf16.msra.mxu0 0
    %1291 = vmatprep.subr.bf16.mxu0 0
    %1292 = vmatpush1.bf16.msra.mxu0 0
    %1293 = vmatprep.subr.bf16.mxu0 0
    %1294 = vmatpush1.bf16.msra.mxu0 0
    %1295 = vmatprep.subr.bf16.mxu0 0
    %1296 = vmatpush1.bf16.msra.mxu0 0
    %1297 = vmatprep.subr.bf16.mxu0 0
    %1298 = vmatpush1.bf16.msra.mxu0 0
    %1299 = vmatprep.subr.bf16.mxu0 0
    %1300 = vmatpush1.bf16.msra.mxu0 0
    %1301 = vmatprep.subr.bf16.mxu0 0
    %1302 = vmatpush1.bf16.msra.mxu0 0
    %1303 = vmatprep.mubr.bf16.mxu0 0
    %1304 = vmatmul.mubr.bf16.gmra.mrb[0].mxu0 %v1256
    %v1305 = vpop.f32.mrb[0].mxu0
    %v1306 = vadd.f32 %v1236, %v1305
    %v1307 = vpop.f32.mrb[0].mxu0
    %v1308 = vadd.f32 %v1236, %v1307
    %v1309 = vpop.f32.mrb[0].mxu0
    %v1310 = vpop.f32.mrb[0].mxu0
    %1311 = vdwg.mxu0
    %1312 = vmatprep.subr.bf16.mxu0 %v1269
    %1313 = vmatpush1.bf16.msra.mxu0 %v1266
    %1314 = vmatprep.subr.bf16.mxu0 0
    %1315 = vmatpush1.bf16.msra.mxu0 0
    %1316 = vmatprep.subr.bf16.mxu0 0
    %1317 = vmatpush1.bf16.msra.mxu0 0
    %1318 = vmatprep.subr.bf16.mxu0 0
    %1319 = vmatpush1.bf16.msra.mxu0 0
    %1320 = vmatprep.subr.bf16.mxu0 0
    %1321 = vmatpush1.bf16.msra.mxu0 0
    %1322 = vmatprep.subr.bf16.mxu0 0
    %1323 = vmatpush1.bf16.msra.mxu0 0
    %1324 = vmatprep.subr.bf16.mxu0 0
    %1325 = vmatpush1.bf16.msra.mxu0 0
    %1326 = vmatprep.subr.bf16.mxu0 0
    %1327 = vmatpush1.bf16.msra.mxu0 0
    %1328 = vmatprep.subr.bf16.mxu0 0
    %1329 = vmatpush1.bf16.msra.mxu0 0
    %1330 = vmatprep.subr.bf16.mxu0 0
    %1331 = vmatpush1.bf16.msra.mxu0 0
    %1332 = vmatprep.subr.bf16.mxu0 0
    %1333 = vmatpush1.bf16.msra.mxu0 0
    %1334 = vmatprep.subr.bf16.mxu0 0
    %1335 = vmatpush1.bf16.msra.mxu0 0
    %1336 = vmatprep.subr.bf16.mxu0 0
    %1337 = vmatpush1.bf16.msra.mxu0 0
    %1338 = vmatprep.subr.bf16.mxu0 0
    %1339 = vmatpush1.bf16.msra.mxu0 0
    %1340 = vmatprep.subr.bf16.mxu0 0
    %1341 = vmatpush1.bf16.msra.mxu0 0
    %1342 = vmatprep.subr.bf16.mxu0 0
    %1343 = vmatpush1.bf16.msra.mxu0 0
    %1344 = vmatprep.mubr.bf16.mxu0 0
    %1345 = vmatmul.mubr.bf16.gmra.mrb[0].mxu0 %v1256
    %v1346 = vpop.f32.mrb[0].mxu0
    %v1347 = vadd.f32 %v1236, %v1346
    %v1348 = vpop.f32.mrb[0].mxu0
    %v1349 = vadd.f32 %v1236, %v1348
    %v1350 = vpop.f32.mrb[0].mxu0
    %v1351 = vpop.f32.mrb[0].mxu0
    %1352 = vdwg.mxu0
    %v1353 = vmax.f32 %v1306, 0.0
    %v1354 = vmax.f32 %v1308, 0.0
    %v1355 = vmax.f32 %v1347, 0.0
    %v1356 = vmax.f32 %v1349, 0.0
    %v1357 = vpack.c.bf16 %v1353, %v1353
    %v1358 = vpack.c.bf16 %v1354, %v1354
    %v1359 = vpack.c.bf16 %v1355, %v1355
    %v1360 = vpack.c.bf16 %v1356, %v1356
    %v1361 = vld [vmem:[%s8] sm:$0xf]
    %v1362 = vld [vmem:[%s8 + $0x4] sm:$0xf]
    %v1363 = vld [vmem:[%s8 + $0x8] sm:$0xf]
    %v1367 = vunpack.c.l.b16 %v1361
    %v1368 = vunpack.c.l.b16 %v1362
    %v1369 = vunpack.c.l.b16 %v1363
    %v1370 = vpack.c.b16 %v1368, %v1367
    %v1371 = vpack.c.b16 %v1369, %v1369
    %v1373 = vsel %vm442, %v1370, 0
    %v1376 = vsel %vm442, %v1371, 0
    %v1379 = vsel %vm449, %v1357, 0
    %v1382 = vsel %vm449, %v1358, 0
    %v1385 = vsel %vm449, %v1359, 0
    %v1388 = vsel %vm449, %v1360, 0
    %1390 = vmatprep.subr.bf16.mxu0 %v1382
    %1391 = vmatpush1.bf16.msra.mxu0 %v1379
    %1392 = vmatprep.subr.bf16.mxu0 0
    %1393 = vmatpush1.bf16.msra.mxu0 0
    %1394 = vmatprep.subr.bf16.mxu0 0
    %1395 = vmatpush1.bf16.msra.mxu0 0
    %1396 = vmatprep.subr.bf16.mxu0 0
    %1397 = vmatpush1.bf16.msra.mxu0 0
    %1398 = vmatprep.subr.bf16.mxu0 0
    %1399 = vmatpush1.bf16.msra.mxu0 0
    %1400 = vmatprep.subr.bf16.mxu0 0
    %1401 = vmatpush1.bf16.msra.mxu0 0
    %1402 = vmatprep.subr.bf16.mxu0 0
    %1403 = vmatpush1.bf16.msra.mxu0 0
    %1404 = vmatprep.subr.bf16.mxu0 0
    %1405 = vmatpush1.bf16.msra.mxu0 0
    %1406 = vmatprep.subr.bf16.mxu0 0
    %1407 = vmatpush1.bf16.msra.mxu0 0
    %1408 = vmatprep.subr.bf16.mxu0 0
    %1409 = vmatpush1.bf16.msra.mxu0 0
    %1410 = vmatprep.subr.bf16.mxu0 0
    %1411 = vmatpush1.bf16.msra.mxu0 0
    %1412 = vmatprep.subr.bf16.mxu0 0
    %1413 = vmatpush1.bf16.msra.mxu0 0
    %1414 = vmatprep.subr.bf16.mxu0 0
    %1415 = vmatpush1.bf16.msra.mxu0 0
    %1416 = vmatprep.subr.bf16.mxu0 0
    %1417 = vmatpush1.bf16.msra.mxu0 0
    %1418 = vmatprep.subr.bf16.mxu0 0
    %1419 = vmatpush1.bf16.msra.mxu0 0
    %1420 = vmatprep.subr.bf16.mxu0 0
    %1421 = vmatpush1.bf16.msra.mxu0 0
    %1422 = vmatprep.mubr.bf16.mxu0 0
    %1423 = vmatmul.mubr.bf16.gmra.mrb[0].mxu0 %v1373
    %v1424 = vpop.f32.mrb[0].mxu0
    %v1425 = vadd.f32 0.0, %v1424
    %v1426 = vpop.f32.mrb[0].mxu0
    %v1427 = vadd.f32 0.0, %v1426
    %v1428 = vpop.f32.mrb[0].mxu0
    %v1429 = vadd.f32 0.0, %v1428
    %v1430 = vpop.f32.mrb[0].mxu0
    %v1431 = vadd.f32 0.0, %v1430
    %1432 = vmatprep.mubr.bf16.mxu0 0
    %1433 = vmatmul.mubr.bf16.gmra.mrb[0].mxu0 %v1376
    %v1434 = vpop.f32.mrb[0].mxu0
    %v1435 = vadd.f32 0.0, %v1434
    %v1436 = vpop.f32.mrb[0].mxu0
    %v1437 = vadd.f32 0.0, %v1436
    %v1438 = vpop.f32.mrb[0].mxu0
    %v1439 = vpop.f32.mrb[0].mxu0
    %1440 = vdwg.mxu0
    %1441 = vmatprep.subr.bf16.mxu0 %v1388
    %1442 = vmatpush1.bf16.msra.mxu0 %v1385
    %1443 = vmatprep.subr.bf16.mxu0 0
    %1444 = vmatpush1.bf16.msra.mxu0 0
    %1445 = vmatprep.subr.bf16.mxu0 0
    %1446 = vmatpush1.bf16.msra.mxu0 0
    %1447 = vmatprep.subr.bf16.mxu0 0
    %1448 = vmatpush1.bf16.msra.mxu0 0
    %1449 = vmatprep.subr.bf16.mxu0 0
    %1450 = vmatpush1.bf16.msra.mxu0 0
    %1451 = vmatprep.subr.bf16.mxu0 0
    %1452 = vmatpush1.bf16.msra.mxu0 0
    %1453 = vmatprep.subr.bf16.mxu0 0
    %1454 = vmatpush1.bf16.msra.mxu0 0
    %1455 = vmatprep.subr.bf16.mxu0 0
    %1456 = vmatpush1.bf16.msra.mxu0 0
    %1457 = vmatprep.subr.bf16.mxu0 0
    %1458 = vmatpush1.bf16.msra.mxu0 0
    %1459 = vmatprep.subr.bf16.mxu0 0
    %1460 = vmatpush1.bf16.msra.mxu0 0
    %1461 = vmatprep.subr.bf16.mxu0 0
    %1462 = vmatpush1.bf16.msra.mxu0 0
    %1463 = vmatprep.subr.bf16.mxu0 0
    %1464 = vmatpush1.bf16.msra.mxu0 0
    %1465 = vmatprep.subr.bf16.mxu0 0
    %1466 = vmatpush1.bf16.msra.mxu0 0
    %1467 = vmatprep.subr.bf16.mxu0 0
    %1468 = vmatpush1.bf16.msra.mxu0 0
    %1469 = vmatprep.subr.bf16.mxu0 0
    %1470 = vmatpush1.bf16.msra.mxu0 0
    %1471 = vmatprep.subr.bf16.mxu0 0
    %1472 = vmatpush1.bf16.msra.mxu0 0
    %1473 = vmatprep.mubr.bf16.mxu0 0
    %1474 = vmatmul.mubr.bf16.gmra.mrb[0].mxu0 %v1373
    %v1475 = vpop.f32.mrb[0].mxu0
    %v1476 = vadd.f32 0.0, %v1475
    %v1477 = vpop.f32.mrb[0].mxu0
    %v1478 = vadd.f32 0.0, %v1477
    %v1479 = vpop.f32.mrb[0].mxu0
    %v1480 = vadd.f32 0.0, %v1479
    %v1481 = vpop.f32.mrb[0].mxu0
    %v1482 = vadd.f32 0.0, %v1481
    %1483 = vmatprep.mubr.bf16.mxu0 0
    %1484 = vmatmul.mubr.bf16.gmra.mrb[0].mxu0 %v1376
    %v1485 = vpop.f32.mrb[0].mxu0
    %v1486 = vadd.f32 0.0, %v1485
    %v1487 = vpop.f32.mrb[0].mxu0
    %v1488 = vadd.f32 0.0, %v1487
    %v1489 = vpop.f32.mrb[0].mxu0
    %v1490 = vpop.f32.mrb[0].mxu0
    %1491 = vdwg.mxu0
    %1492 = vrot.lane.b32.xlu0 %v1425, 16
    %v1493 = vpop.permute.xlu0 %1492
    %1494 = vrot.lane.b32.xlu0 %v1427, 16
    %v1495 = vpop.permute.xlu0 %1494
    %1496 = vrot.lane.b32.xlu0 %v1476, 16
    %v1497 = vpop.permute.xlu0 %1496
    %1498 = vrot.lane.b32.xlu0 %v1478, 16
    %v1499 = vpop.permute.xlu0 %1498
    %v1500 = vsel %vm572, %v1497, %v1499
    %v1501 = vsel %vm572, %v1495, %v1497
    %v1502 = vsel %vm572, %v1493, %v1495
    %v1503 = vsel %vm572, %v1499, %v1493
    %v1504 = vsel %vm581, %v1503, 0.0
    %v1505 = vsel %vm582, %v1502, 0.0
    %v1506 = vsel %vm583, %v1501, 0.0
    %v1507 = vsel %vm584, %v1500, 0.0
    %v1508 = vadd.f32 %v1504, %v1429
    %v1509 = vadd.f32 %v1505, %v1431
    %v1510 = vadd.f32 %v1506, %v1480
    %v1511 = vadd.f32 %v1507, %v1482
    %1512 = vrot.lane.b32.xlu0 %v1435, 112
    %v1513 = vpop.permute.xlu0 %1512
    %1514 = vrot.lane.b32.xlu0 %v1437, 112
    %v1515 = vpop.permute.xlu0 %1514
    %1516 = vrot.lane.b32.xlu0 %v1486, 112
    %v1517 = vpop.permute.xlu0 %1516
    %1518 = vrot.lane.b32.xlu0 %v1488, 112
    %v1519 = vpop.permute.xlu0 %1518
    %v1520 = vsel %vm601, %v1517, %v1519
    %v1521 = vsel %vm601, %v1515, %v1517
    %v1522 = vsel %vm601, %v1513, %v1515
    %v1523 = vsel %vm601, %v1519, %v1513
    %v1524 = vsel %vm610, %v1522, 0.0
    %v1525 = vsel %vm611, %v1521, 0.0
    %v1526 = vsel %vm612, %v1520, 0.0
    %v1527 = vsel %vm613, %v1523, 0.0
    %v1528 = vadd.f32 %v1508, %v1524
    %v1529 = vadd.f32 %v1509, %v1525
    %v1530 = vadd.f32 %v1510, %v1526
    %v1531 = vadd.f32 %v1511, %v1527
    %1532 = vset.pattern.permute.xlu0 1
    %1533 = vperm.xlu0 %1532, %v1227
    %v1534 = vpop.permute.xlu0 %1533
    %v1536 = vadd.f32 %v1528, %v1534
    %v1537 = vadd.f32 %v1529, %v1534
    %v1538 = vadd.f32 %v1530, %v1534
    %v1539 = vadd.f32 %v1531, %v1534
    %v1540 = vpack.c.bf16 %v1536, %v1536
    %v1541 = vpack.c.bf16 %v1537, %v1537
    %v1542 = vpack.c.bf16 %v1538, %v1538
    %v1543 = vpack.c.bf16 %v1539, %v1539
    %v1544 = vld [vmem:[%s9] sm:$0xf]
    %v1545 = vld [vmem:[%s9 + $0x4] sm:$0xf]
    %v1546 = vld [vmem:[%s9 + $0x8] sm:$0xf]
    %v1550 = vunpack.c.l.b16 %v1544
    %v1551 = vunpack.c.l.b16 %v1545
    %v1552 = vunpack.c.l.b16 %v1546
    %v1553 = vpack.c.b16 %v1551, %v1550
    %v1554 = vpack.c.b16 %v1552, %v1552
    %v1556 = vsel %vm442, %v1553, 0
    %v1559 = vsel %vm442, %v1554, 0
    %v1562 = vsel %vm449, %v1540, 0
    %v1565 = vsel %vm449, %v1541, 0
    %v1568 = vsel %vm449, %v1542, 0
    %v1571 = vsel %vm449, %v1543, 0
    %1573 = vmatprep.subr.bf16.mxu0 %v1565
    %1574 = vmatpush1.bf16.msra.mxu0 %v1562
    %1575 = vmatprep.subr.bf16.mxu0 0
    %1576 = vmatpush1.bf16.msra.mxu0 0
    %1577 = vmatprep.subr.bf16.mxu0 0
    %1578 = vmatpush1.bf16.msra.mxu0 0
    %1579 = vmatprep.subr.bf16.mxu0 0
    %1580 = vmatpush1.bf16.msra.mxu0 0
    %1581 = vmatprep.subr.bf16.mxu0 0
    %1582 = vmatpush1.bf16.msra.mxu0 0
    %1583 = vmatprep.subr.bf16.mxu0 0
    %1584 = vmatpush1.bf16.msra.mxu0 0
    %1585 = vmatprep.subr.bf16.mxu0 0
    %1586 = vmatpush1.bf16.msra.mxu0 0
    %1587 = vmatprep.subr.bf16.mxu0 0
    %1588 = vmatpush1.bf16.msra.mxu0 0
    %1589 = vmatprep.subr.bf16.mxu0 0
    %1590 = vmatpush1.bf16.msra.mxu0 0
    %1591 = vmatprep.subr.bf16.mxu0 0
    %1592 = vmatpush1.bf16.msra.mxu0 0
    %1593 = vmatprep.subr.bf16.mxu0 0
    %1594 = vmatpush1.bf16.msra.mxu0 0
    %1595 = vmatprep.subr.bf16.mxu0 0
    %1596 = vmatpush1.bf16.msra.mxu0 0
    %1597 = vmatprep.subr.bf16.mxu0 0
    %1598 = vmatpush1.bf16.msra.mxu0 0
    %1599 = vmatprep.subr.bf16.mxu0 0
    %1600 = vmatpush1.bf16.msra.mxu0 0
    %1601 = vmatprep.subr.bf16.mxu0 0
    %1602 = vmatpush1.bf16.msra.mxu0 0
    %1603 = vmatprep.subr.bf16.mxu0 0
    %1604 = vmatpush1.bf16.msra.mxu0 0
    %1605 = vmatprep.mubr.bf16.mxu0 0
    %1606 = vmatmul.mubr.bf16.gmra.mrb[0].mxu0 %v1556
    %v1607 = vpop.f32.mrb[0].mxu0
    %v1608 = vadd.f32 0.0, %v1607
    %v1609 = vpop.f32.mrb[0].mxu0
    %v1610 = vadd.f32 0.0, %v1609
    %v1611 = vpop.f32.mrb[0].mxu0
    %v1612 = vadd.f32 0.0, %v1611
    %v1613 = vpop.f32.mrb[0].mxu0
    %v1614 = vadd.f32 0.0, %v1613
    %1615 = vmatprep.mubr.bf16.mxu0 0
    %1616 = vmatmul.mubr.bf16.gmra.mrb[0].mxu0 %v1559
    %v1617 = vpop.f32.mrb[0].mxu0
    %v1618 = vadd.f32 0.0, %v1617
    %v1619 = vpop.f32.mrb[0].mxu0
    %v1620 = vadd.f32 0.0, %v1619
    %v1621 = vpop.f32.mrb[0].mxu0
    %v1622 = vpop.f32.mrb[0].mxu0
    %1623 = vdwg.mxu0
    %1624 = vmatprep.subr.bf16.mxu0 %v1571
    %1625 = vmatpush1.bf16.msra.mxu0 %v1568
    %1626 = vmatprep.subr.bf16.mxu0 0
    %1627 = vmatpush1.bf16.msra.mxu0 0
    %1628 = vmatprep.subr.bf16.mxu0 0
    %1629 = vmatpush1.bf16.msra.mxu0 0
    %1630 = vmatprep.subr.bf16.mxu0 0
    %1631 = vmatpush1.bf16.msra.mxu0 0
    %1632 = vmatprep.subr.bf16.mxu0 0
    %1633 = vmatpush1.bf16.msra.mxu0 0
    %1634 = vmatprep.subr.bf16.mxu0 0
    %1635 = vmatpush1.bf16.msra.mxu0 0
    %1636 = vmatprep.subr.bf16.mxu0 0
    %1637 = vmatpush1.bf16.msra.mxu0 0
    %1638 = vmatprep.subr.bf16.mxu0 0
    %1639 = vmatpush1.bf16.msra.mxu0 0
    %1640 = vmatprep.subr.bf16.mxu0 0
    %1641 = vmatpush1.bf16.msra.mxu0 0
    %1642 = vmatprep.subr.bf16.mxu0 0
    %1643 = vmatpush1.bf16.msra.mxu0 0
    %1644 = vmatprep.subr.bf16.mxu0 0
    %1645 = vmatpush1.bf16.msra.mxu0 0
    %1646 = vmatprep.subr.bf16.mxu0 0
    %1647 = vmatpush1.bf16.msra.mxu0 0
    %1648 = vmatprep.subr.bf16.mxu0 0
    %1649 = vmatpush1.bf16.msra.mxu0 0
    %1650 = vmatprep.subr.bf16.mxu0 0
    %1651 = vmatpush1.bf16.msra.mxu0 0
    %1652 = vmatprep.subr.bf16.mxu0 0
    %1653 = vmatpush1.bf16.msra.mxu0 0
    %1654 = vmatprep.subr.bf16.mxu0 0
    %1655 = vmatpush1.bf16.msra.mxu0 0
    %1656 = vmatprep.mubr.bf16.mxu0 0
    %1657 = vmatmul.mubr.bf16.gmra.mrb[0].mxu0 %v1556
    %v1658 = vpop.f32.mrb[0].mxu0
    %v1659 = vadd.f32 0.0, %v1658
    %v1660 = vpop.f32.mrb[0].mxu0
    %v1661 = vadd.f32 0.0, %v1660
    %v1662 = vpop.f32.mrb[0].mxu0
    %v1663 = vadd.f32 0.0, %v1662
    %v1664 = vpop.f32.mrb[0].mxu0
    %v1665 = vadd.f32 0.0, %v1664
    %1666 = vmatprep.mubr.bf16.mxu0 0
    %1667 = vmatmul.mubr.bf16.gmra.mrb[0].mxu0 %v1559
    %v1668 = vpop.f32.mrb[0].mxu0
    %v1669 = vadd.f32 0.0, %v1668
    %v1670 = vpop.f32.mrb[0].mxu0
    %v1671 = vadd.f32 0.0, %v1670
    %v1672 = vpop.f32.mrb[0].mxu0
    %v1673 = vpop.f32.mrb[0].mxu0
    %1674 = vdwg.mxu0
    %1675 = vrot.lane.b32.xlu0 %v1608, 1
    %v1676 = vpop.permute.xlu0 %1675
    %1677 = vrot.lane.b32.xlu0 %v1610, 1
    %v1678 = vpop.permute.xlu0 %1677
    %1679 = vrot.lane.b32.xlu0 %v1659, 1
    %v1680 = vpop.permute.xlu0 %1679
    %1681 = vrot.lane.b32.xlu0 %v1661, 1
    %v1682 = vpop.permute.xlu0 %1681
    %v1683 = vsel %vm773, %v1680, %v1682
    %v1684 = vsel %vm773, %v1678, %v1680
    %v1685 = vsel %vm773, %v1676, %v1678
    %v1686 = vsel %vm773, %v1682, %v1676
    %v1687 = vsel %vm782, %v1686, 0.0
    %v1688 = vsel %vm783, %v1685, 0.0
    %v1689 = vsel %vm784, %v1684, 0.0
    %v1690 = vsel %vm785, %v1683, 0.0
    %v1691 = vadd.f32 %v1687, %v1612
    %v1692 = vadd.f32 %v1688, %v1614
    %v1693 = vadd.f32 %v1689, %v1663
    %v1694 = vadd.f32 %v1690, %v1665
    %1695 = vrot.lane.b32.xlu0 %v1618, 127
    %v1696 = vpop.permute.xlu0 %1695
    %1697 = vrot.lane.b32.xlu0 %v1620, 127
    %v1698 = vpop.permute.xlu0 %1697
    %1699 = vrot.lane.b32.xlu0 %v1669, 127
    %v1700 = vpop.permute.xlu0 %1699
    %1701 = vrot.lane.b32.xlu0 %v1671, 127
    %v1702 = vpop.permute.xlu0 %1701
    %v1703 = vsel %vm802, %v1700, %v1702
    %v1704 = vsel %vm802, %v1698, %v1700
    %v1705 = vsel %vm802, %v1696, %v1698
    %v1706 = vsel %vm802, %v1702, %v1696
    %v1707 = vsel %vm811, %v1705, 0.0
    %v1708 = vsel %vm812, %v1704, 0.0
    %v1709 = vsel %vm813, %v1703, 0.0
    %v1710 = vsel %vm814, %v1706, 0.0
    %v1711 = vadd.f32 %v1691, %v1707
    %v1712 = vadd.f32 %v1692, %v1708
    %v1713 = vadd.f32 %v1693, %v1709
    %v1714 = vadd.f32 %v1694, %v1710
    %1715 = vset.pattern.permute.xlu0 2
    %1716 = vperm.xlu0 %1715, %v1227
    %v1717 = vpop.permute.xlu0 %1716
    %v1719 = vadd.f32 %v1711, %v1717
    %v1720 = vadd.f32 %v1712, %v1717
    %v1721 = vadd.f32 %v1713, %v1717
    %v1722 = vadd.f32 %v1714, %v1717
    %v1723 = vmax.f32 %v1719, 0.0
    %v1724 = vmax.f32 %v1720, 0.0
    %v1725 = vmax.f32 %v1721, 0.0
    %v1726 = vmax.f32 %v1722, 0.0
    %v1727 = vpack.c.bf16 %v1723, %v1723
    %v1728 = vpack.c.bf16 %v1724, %v1724
    %v1729 = vpack.c.bf16 %v1725, %v1725
    %v1730 = vpack.c.bf16 %v1726, %v1726
    %v1731 = vld [vmem:[%s10] sm:$0xf]
    %v1732 = vld [vmem:[%s10 + $0x4] sm:$0xf]
    %v1733 = vld [vmem:[%s10 + $0x8] sm:$0xf]
    %v1737 = vunpack.c.l.b16 %v1731
    %v1738 = vunpack.c.l.b16 %v1732
    %v1739 = vunpack.c.l.b16 %v1733
    %v1740 = vpack.c.b16 %v1738, %v1737
    %v1741 = vpack.c.b16 %v1739, %v1739
    %v1743 = vsel %vm442, %v1740, 0
    %v1746 = vsel %vm442, %v1741, 0
    %v1749 = vsel %vm449, %v1727, 0
    %v1752 = vsel %vm449, %v1728, 0
    %v1755 = vsel %vm449, %v1729, 0
    %v1758 = vsel %vm449, %v1730, 0
    %1760 = vmatprep.subr.bf16.mxu0 %v1752
    %1761 = vmatpush1.bf16.msra.mxu0 %v1749
    %1762 = vmatprep.subr.bf16.mxu0 0
    %1763 = vmatpush1.bf16.msra.mxu0 0
    %1764 = vmatprep.subr.bf16.mxu0 0
    %1765 = vmatpush1.bf16.msra.mxu0 0
    %1766 = vmatprep.subr.bf16.mxu0 0
    %1767 = vmatpush1.bf16.msra.mxu0 0
    %1768 = vmatprep.subr.bf16.mxu0 0
    %1769 = vmatpush1.bf16.msra.mxu0 0
    %1770 = vmatprep.subr.bf16.mxu0 0
    %1771 = vmatpush1.bf16.msra.mxu0 0
    %1772 = vmatprep.subr.bf16.mxu0 0
    %1773 = vmatpush1.bf16.msra.mxu0 0
    %1774 = vmatprep.subr.bf16.mxu0 0
    %1775 = vmatpush1.bf16.msra.mxu0 0
    %1776 = vmatprep.subr.bf16.mxu0 0
    %1777 = vmatpush1.bf16.msra.mxu0 0
    %1778 = vmatprep.subr.bf16.mxu0 0
    %1779 = vmatpush1.bf16.msra.mxu0 0
    %1780 = vmatprep.subr.bf16.mxu0 0
    %1781 = vmatpush1.bf16.msra.mxu0 0
    %1782 = vmatprep.subr.bf16.mxu0 0
    %1783 = vmatpush1.bf16.msra.mxu0 0
    %1784 = vmatprep.subr.bf16.mxu0 0
    %1785 = vmatpush1.bf16.msra.mxu0 0
    %1786 = vmatprep.subr.bf16.mxu0 0
    %1787 = vmatpush1.bf16.msra.mxu0 0
    %1788 = vmatprep.subr.bf16.mxu0 0
    %1789 = vmatpush1.bf16.msra.mxu0 0
    %1790 = vmatprep.subr.bf16.mxu0 0
    %1791 = vmatpush1.bf16.msra.mxu0 0
    %1792 = vmatprep.mubr.bf16.mxu0 0
    %1793 = vmatmul.mubr.bf16.gmra.mrb[0].mxu0 %v1743
    %v1794 = vpop.f32.mrb[0].mxu0
    %v1795 = vadd.f32 0.0, %v1794
    %v1796 = vpop.f32.mrb[0].mxu0
    %v1797 = vadd.f32 0.0, %v1796
    %v1798 = vpop.f32.mrb[0].mxu0
    %v1799 = vadd.f32 0.0, %v1798
    %v1800 = vpop.f32.mrb[0].mxu0
    %v1801 = vadd.f32 0.0, %v1800
    %1802 = vmatprep.mubr.bf16.mxu0 0
    %1803 = vmatmul.mubr.bf16.gmra.mrb[0].mxu0 %v1746
    %v1804 = vpop.f32.mrb[0].mxu0
    %v1805 = vadd.f32 0.0, %v1804
    %v1806 = vpop.f32.mrb[0].mxu0
    %v1807 = vadd.f32 0.0, %v1806
    %v1808 = vpop.f32.mrb[0].mxu0
    %v1809 = vpop.f32.mrb[0].mxu0
    %1810 = vdwg.mxu0
    %1811 = vmatprep.subr.bf16.mxu0 %v1758
    %1812 = vmatpush1.bf16.msra.mxu0 %v1755
    %1813 = vmatprep.subr.bf16.mxu0 0
    %1814 = vmatpush1.bf16.msra.mxu0 0
    %1815 = vmatprep.subr.bf16.mxu0 0
    %1816 = vmatpush1.bf16.msra.mxu0 0
    %1817 = vmatprep.subr.bf16.mxu0 0
    %1818 = vmatpush1.bf16.msra.mxu0 0
    %1819 = vmatprep.subr.bf16.mxu0 0
    %1820 = vmatpush1.bf16.msra.mxu0 0
    %1821 = vmatprep.subr.bf16.mxu0 0
    %1822 = vmatpush1.bf16.msra.mxu0 0
    %1823 = vmatprep.subr.bf16.mxu0 0
    %1824 = vmatpush1.bf16.msra.mxu0 0
    %1825 = vmatprep.subr.bf16.mxu0 0
    %1826 = vmatpush1.bf16.msra.mxu0 0
    %1827 = vmatprep.subr.bf16.mxu0 0
    %1828 = vmatpush1.bf16.msra.mxu0 0
    %1829 = vmatprep.subr.bf16.mxu0 0
    %1830 = vmatpush1.bf16.msra.mxu0 0
    %1831 = vmatprep.subr.bf16.mxu0 0
    %1832 = vmatpush1.bf16.msra.mxu0 0
    %1833 = vmatprep.subr.bf16.mxu0 0
    %1834 = vmatpush1.bf16.msra.mxu0 0
    %1835 = vmatprep.subr.bf16.mxu0 0
    %1836 = vmatpush1.bf16.msra.mxu0 0
    %1837 = vmatprep.subr.bf16.mxu0 0
    %1838 = vmatpush1.bf16.msra.mxu0 0
    %1839 = vmatprep.subr.bf16.mxu0 0
    %1840 = vmatpush1.bf16.msra.mxu0 0
    %1841 = vmatprep.subr.bf16.mxu0 0
    %1842 = vmatpush1.bf16.msra.mxu0 0
    %1843 = vmatprep.mubr.bf16.mxu0 0
    %1844 = vmatmul.mubr.bf16.gmra.mrb[0].mxu0 %v1743
    %v1845 = vpop.f32.mrb[0].mxu0
    %v1846 = vadd.f32 0.0, %v1845
    %v1847 = vpop.f32.mrb[0].mxu0
    %v1848 = vadd.f32 0.0, %v1847
    %v1849 = vpop.f32.mrb[0].mxu0
    %v1850 = vadd.f32 0.0, %v1849
    %v1851 = vpop.f32.mrb[0].mxu0
    %v1852 = vadd.f32 0.0, %v1851
    %1853 = vmatprep.mubr.bf16.mxu0 0
    %1854 = vmatmul.mubr.bf16.gmra.mrb[0].mxu0 %v1746
    %v1855 = vpop.f32.mrb[0].mxu0
    %v1856 = vadd.f32 0.0, %v1855
    %v1857 = vpop.f32.mrb[0].mxu0
    %v1858 = vadd.f32 0.0, %v1857
    %v1859 = vpop.f32.mrb[0].mxu0
    %v1860 = vpop.f32.mrb[0].mxu0
    %1861 = vdwg.mxu0
    %1862 = vrot.lane.b32.xlu0 %v1795, 32
    %v1863 = vpop.permute.xlu0 %1862
    %1864 = vrot.lane.b32.xlu0 %v1797, 32
    %v1865 = vpop.permute.xlu0 %1864
    %1866 = vrot.lane.b32.xlu0 %v1846, 32
    %v1867 = vpop.permute.xlu0 %1866
    %1868 = vrot.lane.b32.xlu0 %v1848, 32
    %v1869 = vpop.permute.xlu0 %1868
    %vm1870 = vcmp.lt.s32.totalorder %v77, 32
    %v1871 = vsel %vm1870, %v1867, %v1869
    %v1872 = vsel %vm1870, %v1865, %v1867
    %v1873 = vsel %vm1870, %v1863, %v1865
    %v1874 = vsel %vm1870, %v1869, %v1863
    %v1875 = vsel %vm301, 1, 0
    %v1876 = vsel %vm302, 1, 0
    %v1877 = vsel %vm303, 1, 0
    %v1878 = vsel %vm304, 1, 0
    %vm1879 = vcmp.eq.s32.totalorder %v1875, 1
    %vm1880 = vcmp.eq.s32.totalorder %v1876, 1
    %vm1881 = vcmp.eq.s32.totalorder %v1877, 1
    %vm1882 = vcmp.eq.s32.totalorder %v1878, 1
    %v1883 = vsel %vm1879, %v1874, 0.0
    %v1884 = vsel %vm1880, %v1873, 0.0
    %v1885 = vsel %vm1881, %v1872, 0.0
    %v1886 = vsel %vm1882, %v1871, 0.0
    %v1887 = vadd.f32 %v1883, %v1799
    %v1888 = vadd.f32 %v1884, %v1801
    %v1889 = vadd.f32 %v1885, %v1850
    %v1890 = vadd.f32 %v1886, %v1852
    %1891 = vrot.lane.b32.xlu0 %v1805, 96
    %v1892 = vpop.permute.xlu0 %1891
    %1893 = vrot.lane.b32.xlu0 %v1807, 96
    %v1894 = vpop.permute.xlu0 %1893
    %1895 = vrot.lane.b32.xlu0 %v1856, 96
    %v1896 = vpop.permute.xlu0 %1895
    %1897 = vrot.lane.b32.xlu0 %v1858, 96
    %v1898 = vpop.permute.xlu0 %1897
    %vm1899 = vcmp.lt.s32.totalorder %v77, 96
    %v1900 = vsel %vm1899, %v1896, %v1898
    %v1901 = vsel %vm1899, %v1894, %v1896
    %v1902 = vsel %vm1899, %v1892, %v1894
    %v1903 = vsel %vm1899, %v1898, %v1892
    %v1904 = vsel %vm285, 1, 0
    %v1905 = vsel %vm286, 1, 0
    %v1906 = vsel %vm287, 1, 0
    %v1907 = vsel %vm288, 1, 0
    %vm1908 = vcmp.eq.s32.totalorder %v1904, 1
    %vm1909 = vcmp.eq.s32.totalorder %v1905, 1
    %vm1910 = vcmp.eq.s32.totalorder %v1906, 1
    %vm1911 = vcmp.eq.s32.totalorder %v1907, 1
    %v1912 = vsel %vm1908, %v1902, 0.0
    %v1913 = vsel %vm1909, %v1901, 0.0
    %v1914 = vsel %vm1910, %v1900, 0.0
    %v1915 = vsel %vm1911, %v1903, 0.0
    %v1916 = vadd.f32 %v1887, %v1912
    %v1917 = vadd.f32 %v1888, %v1913
    %v1918 = vadd.f32 %v1889, %v1914
    %v1919 = vadd.f32 %v1890, %v1915
    %1920 = vset.pattern.permute.xlu0 3
    %1921 = vperm.xlu0 %1920, %v1227
    %v1922 = vpop.permute.xlu0 %1921
    %v1924 = vadd.f32 %v1916, %v1922
    %v1925 = vadd.f32 %v1917, %v1922
    %v1926 = vadd.f32 %v1918, %v1922
    %v1927 = vadd.f32 %v1919, %v1922
    %v1928 = vpack.c.bf16 %v1924, %v1924
    %v1929 = vpack.c.bf16 %v1925, %v1925
    %v1930 = vpack.c.bf16 %v1926, %v1926
    %v1931 = vpack.c.bf16 %v1927, %v1927
    %v1932 = vld [vmem:[%s11] sm:$0xf]
    %v1933 = vld [vmem:[%s11 + $0x4] sm:$0xf]
    %v1934 = vld [vmem:[%s11 + $0x8] sm:$0xf]
    %v1938 = vunpack.c.l.b16 %v1932
    %v1939 = vunpack.c.l.b16 %v1933
    %v1940 = vunpack.c.l.b16 %v1934
    %v1941 = vpack.c.b16 %v1939, %v1938
    %v1942 = vpack.c.b16 %v1940, %v1940
    %v1944 = vsel %vm442, %v1941, 0
    %v1947 = vsel %vm442, %v1942, 0
    %v1950 = vsel %vm449, %v1928, 0
    %v1953 = vsel %vm449, %v1929, 0
    %v1956 = vsel %vm449, %v1930, 0
    %v1959 = vsel %vm449, %v1931, 0
    %1961 = vmatprep.subr.bf16.mxu0 %v1953
    %1962 = vmatpush1.bf16.msra.mxu0 %v1950
    %1963 = vmatprep.subr.bf16.mxu0 0
    %1964 = vmatpush1.bf16.msra.mxu0 0
    %1965 = vmatprep.subr.bf16.mxu0 0
    %1966 = vmatpush1.bf16.msra.mxu0 0
    %1967 = vmatprep.subr.bf16.mxu0 0
    %1968 = vmatpush1.bf16.msra.mxu0 0
    %1969 = vmatprep.subr.bf16.mxu0 0
    %1970 = vmatpush1.bf16.msra.mxu0 0
    %1971 = vmatprep.subr.bf16.mxu0 0
    %1972 = vmatpush1.bf16.msra.mxu0 0
    %1973 = vmatprep.subr.bf16.mxu0 0
    %1974 = vmatpush1.bf16.msra.mxu0 0
    %1975 = vmatprep.subr.bf16.mxu0 0
    %1976 = vmatpush1.bf16.msra.mxu0 0
    %1977 = vmatprep.subr.bf16.mxu0 0
    %1978 = vmatpush1.bf16.msra.mxu0 0
    %1979 = vmatprep.subr.bf16.mxu0 0
    %1980 = vmatpush1.bf16.msra.mxu0 0
    %1981 = vmatprep.subr.bf16.mxu0 0
    %1982 = vmatpush1.bf16.msra.mxu0 0
    %1983 = vmatprep.subr.bf16.mxu0 0
    %1984 = vmatpush1.bf16.msra.mxu0 0
    %1985 = vmatprep.subr.bf16.mxu0 0
    %1986 = vmatpush1.bf16.msra.mxu0 0
    %1987 = vmatprep.subr.bf16.mxu0 0
    %1988 = vmatpush1.bf16.msra.mxu0 0
    %1989 = vmatprep.subr.bf16.mxu0 0
    %1990 = vmatpush1.bf16.msra.mxu0 0
    %1991 = vmatprep.subr.bf16.mxu0 0
    %1992 = vmatpush1.bf16.msra.mxu0 0
    %1993 = vmatprep.mubr.bf16.mxu0 0
    %1994 = vmatmul.mubr.bf16.gmra.mrb[0].mxu0 %v1944
    %v1995 = vpop.f32.mrb[0].mxu0
    %v1996 = vadd.f32 0.0, %v1995
    %v1997 = vpop.f32.mrb[0].mxu0
    %v1998 = vadd.f32 0.0, %v1997
    %v1999 = vpop.f32.mrb[0].mxu0
    %v2000 = vadd.f32 0.0, %v1999
    %v2001 = vpop.f32.mrb[0].mxu0
    %v2002 = vadd.f32 0.0, %v2001
    %2003 = vmatprep.mubr.bf16.mxu0 0
    %2004 = vmatmul.mubr.bf16.gmra.mrb[0].mxu0 %v1947
    %v2005 = vpop.f32.mrb[0].mxu0
    %v2006 = vadd.f32 0.0, %v2005
    %v2007 = vpop.f32.mrb[0].mxu0
    %v2008 = vadd.f32 0.0, %v2007
    %v2009 = vpop.f32.mrb[0].mxu0
    %v2010 = vpop.f32.mrb[0].mxu0
    %2011 = vdwg.mxu0
    %2012 = vmatprep.subr.bf16.mxu0 %v1959
    %2013 = vmatpush1.bf16.msra.mxu0 %v1956
    %2014 = vmatprep.subr.bf16.mxu0 0
    %2015 = vmatpush1.bf16.msra.mxu0 0
    %2016 = vmatprep.subr.bf16.mxu0 0
    %2017 = vmatpush1.bf16.msra.mxu0 0
    %2018 = vmatprep.subr.bf16.mxu0 0
    %2019 = vmatpush1.bf16.msra.mxu0 0
    %2020 = vmatprep.subr.bf16.mxu0 0
    %2021 = vmatpush1.bf16.msra.mxu0 0
    %2022 = vmatprep.subr.bf16.mxu0 0
    %2023 = vmatpush1.bf16.msra.mxu0 0
    %2024 = vmatprep.subr.bf16.mxu0 0
    %2025 = vmatpush1.bf16.msra.mxu0 0
    %2026 = vmatprep.subr.bf16.mxu0 0
    %2027 = vmatpush1.bf16.msra.mxu0 0
    %2028 = vmatprep.subr.bf16.mxu0 0
    %2029 = vmatpush1.bf16.msra.mxu0 0
    %2030 = vmatprep.subr.bf16.mxu0 0
    %2031 = vmatpush1.bf16.msra.mxu0 0
    %2032 = vmatprep.subr.bf16.mxu0 0
    %2033 = vmatpush1.bf16.msra.mxu0 0
    %2034 = vmatprep.subr.bf16.mxu0 0
    %2035 = vmatpush1.bf16.msra.mxu0 0
    %2036 = vmatprep.subr.bf16.mxu0 0
    %2037 = vmatpush1.bf16.msra.mxu0 0
    %2038 = vmatprep.subr.bf16.mxu0 0
    %2039 = vmatpush1.bf16.msra.mxu0 0
    %2040 = vmatprep.subr.bf16.mxu0 0
    %2041 = vmatpush1.bf16.msra.mxu0 0
    %2042 = vmatprep.subr.bf16.mxu0 0
    %2043 = vmatpush1.bf16.msra.mxu0 0
    %2044 = vmatprep.mubr.bf16.mxu0 0
    %2045 = vmatmul.mubr.bf16.gmra.mrb[0].mxu0 %v1944
    %v2046 = vpop.f32.mrb[0].mxu0
    %v2047 = vadd.f32 0.0, %v2046
    %v2048 = vpop.f32.mrb[0].mxu0
    %v2049 = vadd.f32 0.0, %v2048
    %v2050 = vpop.f32.mrb[0].mxu0
    %v2051 = vadd.f32 0.0, %v2050
    %v2052 = vpop.f32.mrb[0].mxu0
    %v2053 = vadd.f32 0.0, %v2052
    %2054 = vmatprep.mubr.bf16.mxu0 0
    %2055 = vmatmul.mubr.bf16.gmra.mrb[0].mxu0 %v1947
    %v2056 = vpop.f32.mrb[0].mxu0
    %v2057 = vadd.f32 0.0, %v2056
    %v2058 = vpop.f32.mrb[0].mxu0
    %v2059 = vadd.f32 0.0, %v2058
    %v2060 = vpop.f32.mrb[0].mxu0
    %v2061 = vpop.f32.mrb[0].mxu0
    %2062 = vdwg.mxu0
    %2063 = vrot.lane.b32.xlu0 %v1996, 2
    %v2064 = vpop.permute.xlu0 %2063
    %2065 = vrot.lane.b32.xlu0 %v1998, 2
    %v2066 = vpop.permute.xlu0 %2065
    %2067 = vrot.lane.b32.xlu0 %v2047, 2
    %v2068 = vpop.permute.xlu0 %2067
    %2069 = vrot.lane.b32.xlu0 %v2049, 2
    %v2070 = vpop.permute.xlu0 %2069
    %vm2071 = vcmp.lt.s32.totalorder %v77, 2
    %v2072 = vsel %vm2071, %v2068, %v2070
    %v2073 = vsel %vm2071, %v2066, %v2068
    %v2074 = vsel %vm2071, %v2064, %v2066
    %v2075 = vsel %vm2071, %v2070, %v2064
    %v2076 = vsel %vm269, 1, 0
    %v2077 = vsel %vm270, 1, 0
    %v2078 = vsel %vm271, 1, 0
    %v2079 = vsel %vm272, 1, 0
    %vm2080 = vcmp.eq.s32.totalorder %v2076, 1
    %vm2081 = vcmp.eq.s32.totalorder %v2077, 1
    %vm2082 = vcmp.eq.s32.totalorder %v2078, 1
    %vm2083 = vcmp.eq.s32.totalorder %v2079, 1
    %v2084 = vsel %vm2080, %v2075, 0.0
    %v2085 = vsel %vm2081, %v2074, 0.0
    %v2086 = vsel %vm2082, %v2073, 0.0
    %v2087 = vsel %vm2083, %v2072, 0.0
    %v2088 = vadd.f32 %v2084, %v2000
    %v2089 = vadd.f32 %v2085, %v2002
    %v2090 = vadd.f32 %v2086, %v2051
    %v2091 = vadd.f32 %v2087, %v2053
    %2092 = vrot.lane.b32.xlu0 %v2006, 126
    %v2093 = vpop.permute.xlu0 %2092
    %2094 = vrot.lane.b32.xlu0 %v2008, 126
    %v2095 = vpop.permute.xlu0 %2094
    %2096 = vrot.lane.b32.xlu0 %v2057, 126
    %v2097 = vpop.permute.xlu0 %2096
    %2098 = vrot.lane.b32.xlu0 %v2059, 126
    %v2099 = vpop.permute.xlu0 %2098
    %vm2100 = vcmp.lt.s32.totalorder %v77, 126
    %v2101 = vsel %vm2100, %v2097, %v2099
    %v2102 = vsel %vm2100, %v2095, %v2097
    %v2103 = vsel %vm2100, %v2093, %v2095
    %v2104 = vsel %vm2100, %v2099, %v2093
    %v2105 = vsel %vm253, 1, 0
    %v2106 = vsel %vm254, 1, 0
    %v2107 = vsel %vm255, 1, 0
    %v2108 = vsel %vm256, 1, 0
    %vm2109 = vcmp.eq.s32.totalorder %v2105, 1
    %vm2110 = vcmp.eq.s32.totalorder %v2106, 1
    %vm2111 = vcmp.eq.s32.totalorder %v2107, 1
    %vm2112 = vcmp.eq.s32.totalorder %v2108, 1
    %v2113 = vsel %vm2109, %v2103, 0.0
    %v2114 = vsel %vm2110, %v2102, 0.0
    %v2115 = vsel %vm2111, %v2101, 0.0
    %v2116 = vsel %vm2112, %v2104, 0.0
    %v2117 = vadd.f32 %v2088, %v2113
    %v2118 = vadd.f32 %v2089, %v2114
    %v2119 = vadd.f32 %v2090, %v2115
    %v2120 = vadd.f32 %v2091, %v2116
    %2121 = vset.pattern.permute.xlu0 4
    %2122 = vperm.xlu0 %2121, %v1227
    %v2123 = vpop.permute.xlu0 %2122
    %v2125 = vadd.f32 %v2117, %v2123
    %v2126 = vadd.f32 %v2118, %v2123
    %v2127 = vadd.f32 %v2119, %v2123
    %v2128 = vadd.f32 %v2120, %v2123
    %v2129 = vmax.f32 %v2125, 0.0
    %v2130 = vmax.f32 %v2126, 0.0
    %v2131 = vmax.f32 %v2127, 0.0
    %v2132 = vmax.f32 %v2128, 0.0
    %2133 = vst [vmem:[#allocation3] sm:$0xff] %v2129
    %2134 = vst [vmem:[#allocation3 + $0x8] sm:$0xff] %v2130
    %2135 = vst [vmem:[#allocation3 + $0x10] sm:$0xff] %v2131
    %2136 = vst [vmem:[#allocation3 + $0x18] sm:$0xff] %v2132
    %v2137 = vpack.c.bf16 %v2129, %v2129
    %v2138 = vpack.c.bf16 %v2130, %v2130
    %v2139 = vpack.c.bf16 %v2131, %v2131
    %v2140 = vpack.c.bf16 %v2132, %v2132
    %v2145 = vunpack.c.l.b16 %v2137
    %v2146 = vunpack.c.l.b16 %v2138
    %v2147 = vunpack.c.l.b16 %v2139
    %v2148 = vunpack.c.l.b16 %v2140
    %v2149 = vpack.c.b16 %v2146, %v2145
    %v2150 = vpack.c.b16 %v2148, %v2147
    %2153 = vst [vmem:[#allocation2] sm:$0xff] %v2149
    %2154 = vst [vmem:[#allocation2 + $0x8] sm:$0xff] %v2150
    // Predicated region
    $region54: #{tpu_custom_call.1} parent=1 // pred_check
      _
    $region55: #{tpu_custom_call.1} parent=1 // pred_check_branch
      %2156 = sbr.rel (0) target = $region57
    $region56: #{tpu_custom_call.1} parent=1 // pred_region
      %s2158 = ssub.s32 1536, 1536
      %2159 = vsyncadd [#allocation4], %s2158
      %s2160 = sshll.u32 [#allocation3], 4
      %s2161 = int_to_ptr.vmem [resolvable:$true] %s2160
      %2166 = dma.vmem_to_hbm [thread:$0]  %s2161, 1536, %s13, [#allocation4], 512, 512, 32
    $region57: #{tpu_custom_call.1} parent=1 // pred_fallthru
      _
    // Predicated region
    $region58: #{tpu_custom_call.1} parent=1 // pred_check
      _
    $region59: #{tpu_custom_call.1} parent=1 // pred_check_branch
      %2168 = sbr.rel (0) target = $region61
    $region60: #{tpu_custom_call.1} parent=1 // pred_region
      %2169 = dma.done [#allocation4], 1536
    $region61: #{tpu_custom_call.1} parent=1 // pred_fallthru
      _
    %2170 = vsyncpa [#allocation4], 1

</llo_original>
